<compile_context>
chip_gen: v7x
topology: tpu7x:2x2x1
jax: 0.10.0
libtpu: 0.0.40
codegen_flags: <defaults>
</compile_context>

<pallas_src>
import functools

import jax
import jax.numpy as jnp
from jax.experimental import pallas as pl
from jax.experimental.pallas import tpu as pltpu


_EPS = 1e-5


def _detect_vmem_capacity_bytes():
    """Physical VMEM of the local TPU generation (fallback: 64 MiB = v7x size)."""
    try:
        info = pltpu.get_tpu_info()
    except Exception:
        return 64 << 20
    for attr in ("vmem_capacity_bytes", "vmem_bytes", "vmem_size_bytes"):
        try:
            val = int(getattr(info, attr))
        except (AttributeError, TypeError, ValueError):
            continue
        if val > 0:
            return val
    return 64 << 20


_VMEM_CAP = _detect_vmem_capacity_bytes()
# Generation-aware budgets: leave headroom on v7x (64 MiB), use v5e/v6e's 128 MiB.
_VMEM_LIMIT = int(min(_VMEM_CAP * 3 // 4, 96 << 20))    # scoped-vmem compiler limit
_TILE_BUDGET = int(min(_VMEM_CAP * 3 // 8, 48 << 20))   # our own tiling budget


# ----------------------------- Pallas kernels ------------------------------

def _fused_conv_bn_lrelu_kernel(w_ref, p_ref, g_ref, b_ref, o_ref, *, m_total):
    """Single-tile fused: matmul + BatchNorm (batch stats) + LeakyReLU(0.2) -> bf16."""
    # (Cout, K) @ (K, M) -> (Cout, M), f32 accumulation on the MXU.
    y = jnp.dot(w_ref[...], p_ref[...], preferred_element_type=jnp.float32)
    mean = jnp.sum(y, axis=1, keepdims=True) / m_total            # (Cout, 1)
    mean_sq = jnp.sum(y * y, axis=1, keepdims=True) / m_total
    var = mean_sq - mean * mean                                   # biased variance
    inv = jax.lax.rsqrt(var + _EPS)
    scale = g_ref[...] * inv
    shift = b_ref[...] - mean * scale
    z = y * scale + shift
    o_ref[...] = jnp.where(z > 0.0, z, 0.2 * z).astype(o_ref.dtype)


def _fused_final_kernel(w_ref, p_ref, g_ref, b_ref, w5_ref, sel_ref, o_ref, *, m_total):
    """Layer4 (matmul+BN+LeakyReLU) fused with layer5 (4x4 valid conv + exact sigmoid).

    w5_ref: (Cout, M) layer-5 weights tiled to match the (n, oh, ow) column order.
    sel_ref: (M, N) 0/1 pooling matrix summing each sample's 16 columns.
    """
    y = jnp.dot(w_ref[...], p_ref[...], preferred_element_type=jnp.float32)  # (Cout, M)
    mean = jnp.sum(y, axis=1, keepdims=True) / m_total
    mean_sq = jnp.sum(y * y, axis=1, keepdims=True) / m_total
    var = mean_sq - mean * mean
    inv = jax.lax.rsqrt(var + _EPS)
    scale = g_ref[...] * inv
    shift = b_ref[...] - mean * scale
    z = y * scale + shift
    z = jnp.where(z > 0.0, z, 0.2 * z)                                        # (Cout, M) f32
    prod = z * w5_ref[...]
    pooled = jnp.dot(prod, sel_ref[...], preferred_element_type=jnp.float32)  # (Cout, N)
    s = jnp.sum(pooled, axis=0, keepdims=True)                                # (1, N)
    o_ref[...] = 1.0 / (1.0 + jnp.exp(-s))                                    # exact sigmoid


def _conv_stats_kernel(w_ref, p_ref, y_ref, psum_ref, psumsq_ref):
    """Tiled pass 1 ("parallel"): matmul per M-tile, stream bf16 y, per-tile partials."""
    y = jnp.dot(w_ref[...], p_ref[...], preferred_element_type=jnp.float32)
    y_ref[...] = y.astype(y_ref.dtype)                             # bf16 intermediate
    # Partial sums are taken from the f32 accumulator (before the bf16 cast).
    psum_ref[...] = jnp.sum(y, axis=1, keepdims=True)[None]        # (1, Cout, 1)
    psumsq_ref[...] = jnp.sum(y * y, axis=1, keepdims=True)[None]


def _bn_finalize_kernel(psum_ref, psumsq_ref, g_ref, b_ref, scale_ref, shift_ref,
                        *, m_total):
    """Combine per-tile partial sums into BN scale/shift (tiny, gridless)."""
    total = jnp.sum(psum_ref[...], axis=0)                         # (Cout, 1)
    total_sq = jnp.sum(psumsq_ref[...], axis=0)
    mean = total / m_total
    var = total_sq / m_total - mean * mean
    inv = jax.lax.rsqrt(var + _EPS)
    scale = g_ref[...] * inv
    scale_ref[...] = scale
    shift_ref[...] = b_ref[...] - mean * scale


def _bn_lrelu_kernel(y_ref, scale_ref, shift_ref, o_ref):
    """Tiled pass 2 ("parallel"): affine normalize + LeakyReLU(0.2) per M-tile -> bf16."""
    z = y_ref[...].astype(jnp.float32) * scale_ref[...] + shift_ref[...]
    o_ref[...] = jnp.where(z > 0.0, z, 0.2 * z).astype(o_ref.dtype)


def _conv_sigmoid_kernel(w_ref, p_ref, o_ref):
    y = jnp.dot(w_ref[...], p_ref[...], preferred_element_type=jnp.float32)
    o_ref[...] = 1.0 / (1.0 + jnp.exp(-y))                         # exact sigmoid


# ------------------------------ JAX glue ------------------------------------

def _im2col_cnhw(x, k, stride, pad):
    """x: (C, N, H, W) -> P^T of shape (C*k*k, N*OH*OW).

    Row (K) order is (c, ki, kj) to match torch weight.reshape(Cout, Cin*k*k);
    column (M) order is (n, oh, ow).
    """
    if pad:
        x = jnp.pad(x, ((0, 0), (0, 0), (pad, pad), (pad, pad)))
    C, N, Hp, Wp = x.shape
    OH = (Hp - k) // stride + 1
    OW = (Wp - k) // stride + 1
    cols = []
    for i in range(k):
        for j in range(k):
            cols.append(x[:, :, i:i + stride * OH:stride, j:j + stride * OW:stride])
    cols = jnp.stack(cols, axis=0).reshape(k, k, C, N, OH, OW)
    pt = cols.transpose(2, 0, 1, 3, 4, 5).reshape(C * k * k, N * OH * OW)
    return pt, N, OH, OW


def _vmem_spec():
    return pl.BlockSpec(memory_space=pltpu.MemorySpace.VMEM)


def _choose_tiling(M, K, Cout, tile_budget):
    """Return (tm, n_tiles).  n_tiles == 1 -> fully fused single-block kernel."""
    # Fused footprint: bf16 patches + bf16 W + f32 y temporaries + bf16 out.
    fused_bytes = 2 * K * M + 2 * Cout * K + 6 * Cout * M
    if fused_bytes <= tile_budget:
        return M, 1
    # Tiled: lane-dense (multiple-of-128) M tiles; double-buffered patch + y columns.
    per_col = 2 * (2 * K) + 2 * (2 * Cout)
    resident = 2 * Cout * K
    avail = max(tile_budget - resident, 128 * per_col)
    tm = max(128, min(2048, (avail // per_col) // 128 * 128))
    n_tiles = -(-M // tm)
    return tm, n_tiles


def conv_bn_lrelu(x_cnhw, w, gamma, beta, stride, pad, tile_budget=None):
    """Conv2d(bias=False) + BatchNorm2d (batch stats) + LeakyReLU(0.2).

    x_cnhw: (Cin, N, H, W)  ->  (Cout, N, OH, OW) in bf16.
    """
    if tile_budget is None:
        tile_budget = _TILE_BUDGET
    Cout, Cin, k, _ = w.shape
    pt, N, OH, OW = _im2col_cnhw(x_cnhw, k, stride, pad)            # (K, M)
    K, M = pt.shape
    pt = pt.astype(jnp.bfloat16)
    wmat = w.reshape(Cout, K).astype(jnp.bfloat16)
    g = gamma.reshape(Cout, 1).astype(jnp.float32)
    b = beta.reshape(Cout, 1).astype(jnp.float32)

    tm, n_tiles = _choose_tiling(M, K, Cout, tile_budget)

    if n_tiles == 1:
        # Everything fits in one lane-dense block: fully fused single call.
        out = pl.pallas_call(
            functools.partial(_fused_conv_bn_lrelu_kernel, m_total=float(M)),
            out_shape=jax.ShapeDtypeStruct((Cout, M), jnp.bfloat16),
            in_specs=[_vmem_spec()] * 4,
            out_specs=_vmem_spec(),
            compiler_params=pltpu.CompilerParams(vmem_limit_bytes=_VMEM_LIMIT),
        )(wmat, pt, g, b)
        return out.reshape(Cout, N, OH, OW)

    # ---- Tiled path ----
    M_pad = tm * n_tiles
    if M_pad != M:
        # Zero columns contribute nothing to the BN sums; sliced off afterwards.
        pt = jnp.pad(pt, ((0, 0), (0, M_pad - M)))

    # Pass 1 (parallel, splits across TensorCores on v7x): matmul + per-tile stats.
    y, psum, psumsq = pl.pallas_call(
        _conv_stats_kernel,
        grid=(n_tiles,),
        in_specs=[
            pl.BlockSpec((Cout, K), lambda i: (0, 0)),      # W (resident)
            pl.BlockSpec((K, tm), lambda i: (0, i)),        # patch tile
        ],
        out_specs=(
            pl.BlockSpec((Cout, tm), lambda i: (0, i)),     # y (bf16 conv output)
            pl.BlockSpec((1, Cout, 1), lambda i: (i, 0, 0)),
            pl.BlockSpec((1, Cout, 1), lambda i: (i, 0, 0)),
        ),
        out_shape=(
            jax.ShapeDtypeStruct((Cout, M_pad), jnp.bfloat16),
            jax.ShapeDtypeStruct((n_tiles, Cout, 1), jnp.float32),
            jax.ShapeDtypeStruct((n_tiles, Cout, 1), jnp.float32),
        ),
        compiler_params=pltpu.CompilerParams(
            dimension_semantics=("parallel",),
            vmem_limit_bytes=_VMEM_LIMIT),
    )(wmat, pt)

    # Finalize: combine partials into per-channel scale/shift (tiny).
    # TODO(synk): E[y^2]-E[y]^2 can cancel when |mean| >> std; a shifted two-pass
    #             formulation would be more robust if that regime ever matters.
    scale, shift = pl.pallas_call(
        functools.partial(_bn_finalize_kernel, m_total=float(M)),
        out_shape=(jax.ShapeDtypeStruct((Cout, 1), jnp.float32),
                   jax.ShapeDtypeStruct((Cout, 1), jnp.float32)),
        in_specs=[_vmem_spec()] * 4,
        out_specs=(_vmem_spec(), _vmem_spec()),
        compiler_params=pltpu.CompilerParams(vmem_limit_bytes=_VMEM_LIMIT),
    )(psum, psumsq, g, b)

    # Pass 2 (parallel): normalize + LeakyReLU over M tiles.
    out = pl.pallas_call(
        _bn_lrelu_kernel,
        grid=(n_tiles,),
        in_specs=[
            pl.BlockSpec((Cout, tm), lambda i: (0, i)),
            pl.BlockSpec((Cout, 1), lambda i: (0, 0)),
            pl.BlockSpec((Cout, 1), lambda i: (0, 0)),
        ],
        out_specs=pl.BlockSpec((Cout, tm), lambda i: (0, i)),
        out_shape=jax.ShapeDtypeStruct((Cout, M_pad), jnp.bfloat16),
        compiler_params=pltpu.CompilerParams(
            dimension_semantics=("parallel",),
            vmem_limit_bytes=_VMEM_LIMIT),
    )(y, scale, shift)

    if M_pad != M:
        out = out[:, :M]
    return out.reshape(Cout, N, OH, OW)


def conv_sigmoid(x_cnhw, w, stride, pad):
    """Conv2d(bias=False) + Sigmoid.  Fallback path only (layer 5, large batch)."""
    # TODO(synk): not M-tiled; only used when the fused layer4+5 head does not apply.
    Cout, Cin, k, _ = w.shape
    pt, N, OH, OW = _im2col_cnhw(x_cnhw, k, stride, pad)
    K, M = pt.shape
    out = pl.pallas_call(
        _conv_sigmoid_kernel,
        out_shape=jax.ShapeDtypeStruct((Cout, M), jnp.float32),
        in_specs=[_vmem_spec()] * 2,
        out_specs=_vmem_spec(),
        compiler_params=pltpu.CompilerParams(vmem_limit_bytes=_VMEM_LIMIT),
    )(w.reshape(Cout, K).astype(jnp.bfloat16), pt.astype(jnp.bfloat16))
    return out.reshape(Cout, N, OH, OW)


def conv_bn_lrelu_sigmoid_head(x_cnhw, w4, gamma, beta, w5, stride, pad):
    """Layer 4 (conv+BN+LReLU) fused with layer 5 (4x4 valid conv + sigmoid).

    x_cnhw: (Cin, N, H, W)  ->  (N, 1, 1, 1) f32 discriminator scores.
    Falls back to the unfused two-kernel path when the fused block would not fit
    in VMEM or the layer-4 spatial size is not the DCGAN 4x4.
    """
    Cout, Cin, k, _ = w4.shape
    pt, N, OH, OW = _im2col_cnhw(x_cnhw, k, stride, pad)
    K, M = pt.shape
    tm, n_tiles = _choose_tiling(M, K, Cout, _TILE_BUDGET)

    if n_tiles == 1 and (OH, OW) == (4, 4) and w5.shape == (1, Cout, 4, 4):
        pt = pt.astype(jnp.bfloat16)
        wmat = w4.reshape(Cout, K).astype(jnp.bfloat16)
        g = gamma.reshape(Cout, 1).astype(jnp.float32)
        b = beta.reshape(Cout, 1).astype(jnp.float32)
        # Layer-5 weights tiled to the (n, oh, ow) column order of layer 4's output.
        w5map = jnp.tile(w5.reshape(Cout, 16).astype(jnp.float32), (1, N))   # (Cout, M)
        # Per-sample pooling matrix: column n sums its own 16 spatial columns.
        sel = (jnp.arange(M)[:, None] // 16 == jnp.arange(N)[None, :]).astype(jnp.float32)
        out = pl.pallas_call(
            functools.partial(_fused_final_kernel, m_total=float(M)),
            out_shape=jax.ShapeDtypeStruct((1, N), jnp.float32),
            in_specs=[_vmem_spec()] * 6,
            out_specs=_vmem_spec(),
            compiler_params=pltpu.CompilerParams(vmem_limit_bytes=_VMEM_LIMIT),
        )(wmat, pt, g, b, w5map, sel)
        return out.reshape(N, 1, 1, 1)

    # Fallback: un-fused (large batch or non-64x64 inputs).
    h = conv_bn_lrelu(x_cnhw, w4, gamma, beta, stride, pad)
    o = conv_sigmoid(h, w5, stride=1, pad=0)                       # (1, N, OH5, OW5)
    return o.transpose(1, 0, 2, 3)


# ------------------------------ NetD forward --------------------------------

def init_netd_params(key, ndf):
    ks = jax.random.split(key, 5)

    def conv_w(k, cout, cin):
        return 0.02 * jax.random.normal(k, (cout, cin, 4, 4), jnp.float32)

    return {
        "w1": conv_w(ks[0], ndf, 1),
        "w2": conv_w(ks[1], ndf * 2, ndf),
        "w3": conv_w(ks[2], ndf * 4, ndf * 2),
        "w4": conv_w(ks[3], ndf * 8, ndf * 4),
        "w5": conv_w(ks[4], 1, ndf * 8),
        # BatchNorm2d default init: weight=1, bias=0
        "g1": jnp.ones((ndf,), jnp.float32), "b1": jnp.zeros((ndf,), jnp.float32),
        "g2": jnp.ones((ndf * 2,), jnp.float32), "b2": jnp.zeros((ndf * 2,), jnp.float32),
        "g3": jnp.ones((ndf * 4,), jnp.float32), "b3": jnp.zeros((ndf * 4,), jnp.float32),
        "g4": jnp.ones((ndf * 8,), jnp.float32), "b4": jnp.zeros((ndf * 8,), jnp.float32),
    }


def netd_forward(params, x):
    # NCHW -> channel-major CNHW once at the boundary; bf16 activations throughout.
    h = x.transpose(1, 0, 2, 3).astype(jnp.bfloat16)
    h = conv_bn_lrelu(h, params["w1"], params["g1"], params["b1"], stride=2, pad=1)
    h = conv_bn_lrelu(h, params["w2"], params["g2"], params["b2"], stride=2, pad=1)
    h = conv_bn_lrelu(h, params["w3"], params["g3"], params["b3"], stride=2, pad=1)
    # Layers 4+5 fused: conv+BN+LReLU + 4x4 conv + sigmoid -> (N, 1, 1, 1) f32.
    return conv_bn_lrelu_sigmoid_head(h, params["w4"], params["g4"], params["b4"],
                                      params["w5"], stride=2, pad=1)


if __name__ == "__main__":
    key = jax.random.PRNGKey(0)
    k_params, k_x, k_t1, k_t2, k_t3, k_t4 = jax.random.split(key, 6)

    ndf = 8
    # DCGAN-D expects 64x64 inputs: 64 -> 32 -> 16 -> 8 -> 4 -> 1
    x = jax.random.normal(k_x, (2, 1, 64, 64), jnp.float32)
    params = init_netd_params(k_params, ndf)

    out = jax.jit(netd_forward)(params, x)
    out = jax.block_until_ready(out)

    assert out.shape == (2, 1, 1, 1), out.shape
    assert out.dtype == jnp.float32
    assert bool(jnp.all(jnp.isfinite(out)))
    assert bool(jnp.all((out >= 0.0) & (out <= 1.0)))   # exact sigmoid -> exact range

    # Exercise the tiled (parallel two-pass BN, M-padded) path against the fused
    # single-tile path on a small layer, to validate both code paths on-device.
    xt = jax.random.normal(k_t1, (8, 2, 24, 24), jnp.float32).astype(jnp.bfloat16)
    wt = 0.02 * jax.random.normal(k_t2, (16, 8, 4, 4), jnp.float32)
    gt = 1.0 + 0.1 * jax.random.normal(k_t3, (16,), jnp.float32)
    bt = 0.1 * jax.random.normal(k_t4, (16,), jnp.float32)
    run_fused = jax.jit(lambda a, b, c, d: conv_bn_lrelu(a, b, c, d, 2, 1))
    run_tiled = jax.jit(lambda a, b, c, d: conv_bn_lrelu(a, b, c, d, 2, 1,
                                                         tile_budget=1 << 16))
    ref_fused = jax.block_until_ready(run_fused(xt, wt, gt, bt))
    got_tiled = jax.block_until_ready(run_tiled(xt, wt, gt, bt))
    assert ref_fused.shape == got_tiled.shape == (16, 2, 12, 12)
    diff = jnp.max(jnp.abs(ref_fused.astype(jnp.float32) - got_tiled.astype(jnp.float32)))
    assert bool(diff < 0.05), float(diff)

    print("KERNEL_OK")
</pallas_src>

<mosaic_0001>
module attributes {stable_mosaic.version = 11 : i64} {
  func.func @_fused_conv_bn_lrelu_kernel(%arg0: memref<8x16xbf16, #tpu.memory_space<vmem>>, %arg1: memref<16x2048xbf16, #tpu.memory_space<vmem>>, %arg2: memref<8x1xf32, #tpu.memory_space<vmem>>, %arg3: memref<8x1xf32, #tpu.memory_space<vmem>>, %arg4: memref<8x2048xbf16, #tpu.memory_space<vmem>>) attributes {dimension_semantics = [], scalar_prefetch = 0 : i64, scratch_operands = 0 : i64, tpu.core_type = #tpu.core_type<tc>} {
    %c0 = arith.constant 0 : index
    %c0_0 = arith.constant 0 : index
    %0 = vector.load %arg0[%c0, %c0_0] : memref<8x16xbf16, #tpu.memory_space<vmem>>, vector<8x16xbf16>
    %c0_1 = arith.constant 0 : index
    %c0_2 = arith.constant 0 : index
    %1 = vector.load %arg1[%c0_1, %c0_2] : memref<16x2048xbf16, #tpu.memory_space<vmem>>, vector<16x2048xbf16>
    %cst = arith.constant dense<0.000000e+00> : vector<8x2048xf32>
    %2 = tpu.matmul %0, %1, %cst {dimension_numbers = #tpu.dot_dimension_numbers<[1], [0], [0], [1], [0, 0, 1, 1], [], []>} : vector<8x16xbf16>, vector<16x2048xbf16>, vector<8x2048xf32> -> vector<8x2048xf32>
    %cst_3 = arith.constant dense<0.000000e+00> : vector<8xf32>
    %3 = vector.multi_reduction <add>, %2, %cst_3 [1] : vector<8x2048xf32> to vector<8xf32>
    %4 = vector.shape_cast %3 : vector<8xf32> to vector<8x1xf32>
    %cst_4 = arith.constant 2.048000e+03 : f32
    %5 = vector.broadcast %cst_4 : f32 to vector<8x1xf32>
    %6 = arith.divf %4, %5 : vector<8x1xf32>
    %7 = arith.mulf %2, %2 : vector<8x2048xf32>
    %cst_5 = arith.constant dense<0.000000e+00> : vector<8xf32>
    %8 = vector.multi_reduction <add>, %7, %cst_5 [1] : vector<8x2048xf32> to vector<8xf32>
    %9 = vector.shape_cast %8 : vector<8xf32> to vector<8x1xf32>
    %cst_6 = arith.constant 2.048000e+03 : f32
    %10 = vector.broadcast %cst_6 : f32 to vector<8x1xf32>
    %11 = arith.divf %9, %10 : vector<8x1xf32>
    %12 = arith.mulf %6, %6 : vector<8x1xf32>
    %13 = arith.subf %11, %12 : vector<8x1xf32>
    %cst_7 = arith.constant 9.99999974E-6 : f32
    %14 = vector.broadcast %cst_7 : f32 to vector<8x1xf32>
    %15 = arith.addf %13, %14 : vector<8x1xf32>
    %16 = math.rsqrt %15 : vector<8x1xf32>
    %c0_8 = arith.constant 0 : index
    %c0_9 = arith.constant 0 : index
    %17 = vector.load %arg2[%c0_8, %c0_9] : memref<8x1xf32, #tpu.memory_space<vmem>>, vector<8x1xf32>
    %18 = arith.mulf %17, %16 : vector<8x1xf32>
    %c0_10 = arith.constant 0 : index
    %c0_11 = arith.constant 0 : index
    %19 = vector.load %arg3[%c0_10, %c0_11] : memref<8x1xf32, #tpu.memory_space<vmem>>, vector<8x1xf32>
    %20 = arith.mulf %6, %18 : vector<8x1xf32>
    %21 = arith.subf %19, %20 : vector<8x1xf32>
    %22 = vector.broadcast %18 : vector<8x1xf32> to vector<8x2048xf32>
    %23 = arith.mulf %2, %22 : vector<8x2048xf32>
    %24 = vector.broadcast %21 : vector<8x1xf32> to vector<8x2048xf32>
    %25 = arith.addf %23, %24 : vector<8x2048xf32>
    %cst_12 = arith.constant 0.000000e+00 : f32
    %26 = vector.broadcast %cst_12 : f32 to vector<8x2048xf32>
    %27 = arith.cmpf ogt, %25, %26 : vector<8x2048xf32>
    %cst_13 = arith.constant 2.000000e-01 : f32
    %28 = vector.broadcast %cst_13 : f32 to vector<8x2048xf32>
    %29 = arith.mulf %28, %25 : vector<8x2048xf32>
    %30 = arith.select %27, %25, %29 : vector<8x2048xi1>, vector<8x2048xf32>
    %31 = arith.truncf %30 : vector<8x2048xf32> to vector<8x2048xbf16>
    %c0_14 = arith.constant 0 : index
    %c0_15 = arith.constant 0 : index
    %32 = vector.load %arg4[%c0_14, %c0_15] : memref<8x2048xbf16, #tpu.memory_space<vmem>>, vector<8x2048xbf16>
    tpu.vector_store %arg4[%c0_14, %c0_15], %31 {strides = array<i32>} : memref<8x2048xbf16, #tpu.memory_space<vmem>>, vector<8x2048xbf16>,
    return
  }
}

module attributes {stable_mosaic.version = 11 : i64} {
  func.func @_fused_conv_bn_lrelu_kernel(%arg0: memref<16x128xbf16, #tpu.memory_space<vmem>>, %arg1: memref<128x512xbf16, #tpu.memory_space<vmem>>, %arg2: memref<16x1xf32, #tpu.memory_space<vmem>>, %arg3: memref<16x1xf32, #tpu.memory_space<vmem>>, %arg4: memref<16x512xbf16, #tpu.memory_space<vmem>>) attributes {dimension_semantics = [], scalar_prefetch = 0 : i64, scratch_operands = 0 : i64, tpu.core_type = #tpu.core_type<tc>} {
    %c0 = arith.constant 0 : index
    %c0_0 = arith.constant 0 : index
    %0 = vector.load %arg0[%c0, %c0_0] : memref<16x128xbf16, #tpu.memory_space<vmem>>, vector<16x128xbf16>
    %c0_1 = arith.constant 0 : index
    %c0_2 = arith.constant 0 : index
    %1 = vector.load %arg1[%c0_1, %c0_2] : memref<128x512xbf16, #tpu.memory_space<vmem>>, vector<128x512xbf16>
    %cst = arith.constant dense<0.000000e+00> : vector<16x512xf32>
    %2 = tpu.matmul %0, %1, %cst {dimension_numbers = #tpu.dot_dimension_numbers<[1], [0], [0], [1], [0, 0, 1, 1], [], []>} : vector<16x128xbf16>, vector<128x512xbf16>, vector<16x512xf32> -> vector<16x512xf32>
    %cst_3 = arith.constant dense<0.000000e+00> : vector<16xf32>
    %3 = vector.multi_reduction <add>, %2, %cst_3 [1] : vector<16x512xf32> to vector<16xf32>
    %4 = vector.shape_cast %3 : vector<16xf32> to vector<16x1xf32>
    %cst_4 = arith.constant 5.120000e+02 : f32
    %5 = vector.broadcast %cst_4 : f32 to vector<16x1xf32>
    %6 = arith.divf %4, %5 : vector<16x1xf32>
    %7 = arith.mulf %2, %2 : vector<16x512xf32>
    %cst_5 = arith.constant dense<0.000000e+00> : vector<16xf32>
    %8 = vector.multi_reduction <add>, %7, %cst_5 [1] : vector<16x512xf32> to vector<16xf32>
    %9 = vector.shape_cast %8 : vector<16xf32> to vector<16x1xf32>
    %cst_6 = arith.constant 5.120000e+02 : f32
    %10 = vector.broadcast %cst_6 : f32 to vector<16x1xf32>
    %11 = arith.divf %9, %10 : vector<16x1xf32>
    %12 = arith.mulf %6, %6 : vector<16x1xf32>
    %13 = arith.subf %11, %12 : vector<16x1xf32>
    %cst_7 = arith.constant 9.99999974E-6 : f32
    %14 = vector.broadcast %cst_7 : f32 to vector<16x1xf32>
    %15 = arith.addf %13, %14 : vector<16x1xf32>
    %16 = math.rsqrt %15 : vector<16x1xf32>
    %c0_8 = arith.constant 0 : index
    %c0_9 = arith.constant 0 : index
    %17 = vector.load %arg2[%c0_8, %c0_9] : memref<16x1xf32, #tpu.memory_space<vmem>>, vector<16x1xf32>
    %18 = arith.mulf %17, %16 : vector<16x1xf32>
    %c0_10 = arith.constant 0 : index
    %c0_11 = arith.constant 0 : index
    %19 = vector.load %arg3[%c0_10, %c0_11] : memref<16x1xf32, #tpu.memory_space<vmem>>, vector<16x1xf32>
    %20 = arith.mulf %6, %18 : vector<16x1xf32>
    %21 = arith.subf %19, %20 : vector<16x1xf32>
    %22 = vector.broadcast %18 : vector<16x1xf32> to vector<16x512xf32>
    %23 = arith.mulf %2, %22 : vector<16x512xf32>
    %24 = vector.broadcast %21 : vector<16x1xf32> to vector<16x512xf32>
    %25 = arith.addf %23, %24 : vector<16x512xf32>
    %cst_12 = arith.constant 0.000000e+00 : f32
    %26 = vector.broadcast %cst_12 : f32 to vector<16x512xf32>
    %27 = arith.cmpf ogt, %25, %26 : vector<16x512xf32>
    %cst_13 = arith.constant 2.000000e-01 : f32
    %28 = vector.broadcast %cst_13 : f32 to vector<16x512xf32>
    %29 = arith.mulf %28, %25 : vector<16x512xf32>
    %30 = arith.select %27, %25, %29 : vector<16x512xi1>, vector<16x512xf32>
    %31 = arith.truncf %30 : vector<16x512xf32> to vector<16x512xbf16>
    %c0_14 = arith.constant 0 : index
    %c0_15 = arith.constant 0 : index
    %32 = vector.load %arg4[%c0_14, %c0_15] : memref<16x512xbf16, #tpu.memory_space<vmem>>, vector<16x512xbf16>
    tpu.vector_store %arg4[%c0_14, %c0_15], %31 {strides = array<i32>} : memref<16x512xbf16, #tpu.memory_space<vmem>>, vector<16x512xbf16>,
    return
  }
}

module attributes {stable_mosaic.version = 11 : i64} {
  func.func @_fused_conv_bn_lrelu_kernel(%arg0: memref<32x256xbf16, #tpu.memory_space<vmem>>, %arg1: memref<256x128xbf16, #tpu.memory_space<vmem>>, %arg2: memref<32x1xf32, #tpu.memory_space<vmem>>, %arg3: memref<32x1xf32, #tpu.memory_space<vmem>>, %arg4: memref<32x128xbf16, #tpu.memory_space<vmem>>) attributes {dimension_semantics = [], scalar_prefetch = 0 : i64, scratch_operands = 0 : i64, tpu.core_type = #tpu.core_type<tc>} {
    %c0 = arith.constant 0 : index
    %c0_0 = arith.constant 0 : index
    %0 = vector.load %arg0[%c0, %c0_0] : memref<32x256xbf16, #tpu.memory_space<vmem>>, vector<32x256xbf16>
    %c0_1 = arith.constant 0 : index
    %c0_2 = arith.constant 0 : index
    %1 = vector.load %arg1[%c0_1, %c0_2] : memref<256x128xbf16, #tpu.memory_space<vmem>>, vector<256x128xbf16>
    %cst = arith.constant dense<0.000000e+00> : vector<32x128xf32>
    %2 = tpu.matmul %0, %1, %cst {dimension_numbers = #tpu.dot_dimension_numbers<[1], [0], [0], [1], [0, 0, 1, 1], [], []>} : vector<32x256xbf16>, vector<256x128xbf16>, vector<32x128xf32> -> vector<32x128xf32>
    %cst_3 = arith.constant dense<0.000000e+00> : vector<32xf32>
    %3 = vector.multi_reduction <add>, %2, %cst_3 [1] : vector<32x128xf32> to vector<32xf32>
    %4 = vector.shape_cast %3 : vector<32xf32> to vector<32x1xf32>
    %cst_4 = arith.constant 1.280000e+02 : f32
    %5 = vector.broadcast %cst_4 : f32 to vector<32x1xf32>
    %6 = arith.divf %4, %5 : vector<32x1xf32>
    %7 = arith.mulf %2, %2 : vector<32x128xf32>
    %cst_5 = arith.constant dense<0.000000e+00> : vector<32xf32>
    %8 = vector.multi_reduction <add>, %7, %cst_5 [1] : vector<32x128xf32> to vector<32xf32>
    %9 = vector.shape_cast %8 : vector<32xf32> to vector<32x1xf32>
    %cst_6 = arith.constant 1.280000e+02 : f32
    %10 = vector.broadcast %cst_6 : f32 to vector<32x1xf32>
    %11 = arith.divf %9, %10 : vector<32x1xf32>
    %12 = arith.mulf %6, %6 : vector<32x1xf32>
    %13 = arith.subf %11, %12 : vector<32x1xf32>
    %cst_7 = arith.constant 9.99999974E-6 : f32
    %14 = vector.broadcast %cst_7 : f32 to vector<32x1xf32>
    %15 = arith.addf %13, %14 : vector<32x1xf32>
    %16 = math.rsqrt %15 : vector<32x1xf32>
    %c0_8 = arith.constant 0 : index
    %c0_9 = arith.constant 0 : index
    %17 = vector.load %arg2[%c0_8, %c0_9] : memref<32x1xf32, #tpu.memory_space<vmem>>, vector<32x1xf32>
    %18 = arith.mulf %17, %16 : vector<32x1xf32>
    %c0_10 = arith.constant 0 : index
    %c0_11 = arith.constant 0 : index
    %19 = vector.load %arg3[%c0_10, %c0_11] : memref<32x1xf32, #tpu.memory_space<vmem>>, vector<32x1xf32>
    %20 = arith.mulf %6, %18 : vector<32x1xf32>
    %21 = arith.subf %19, %20 : vector<32x1xf32>
    %22 = vector.broadcast %18 : vector<32x1xf32> to vector<32x128xf32>
    %23 = arith.mulf %2, %22 : vector<32x128xf32>
    %24 = vector.broadcast %21 : vector<32x1xf32> to vector<32x128xf32>
    %25 = arith.addf %23, %24 : vector<32x128xf32>
    %cst_12 = arith.constant 0.000000e+00 : f32
    %26 = vector.broadcast %cst_12 : f32 to vector<32x128xf32>
    %27 = arith.cmpf ogt, %25, %26 : vector<32x128xf32>
    %cst_13 = arith.constant 2.000000e-01 : f32
    %28 = vector.broadcast %cst_13 : f32 to vector<32x128xf32>
    %29 = arith.mulf %28, %25 : vector<32x128xf32>
    %30 = arith.select %27, %25, %29 : vector<32x128xi1>, vector<32x128xf32>
    %31 = arith.truncf %30 : vector<32x128xf32> to vector<32x128xbf16>
    %c0_14 = arith.constant 0 : index
    %c0_15 = arith.constant 0 : index
    %32 = vector.load %arg4[%c0_14, %c0_15] : memref<32x128xbf16, #tpu.memory_space<vmem>>, vector<32x128xbf16>
    tpu.vector_store %arg4[%c0_14, %c0_15], %31 {strides = array<i32>} : memref<32x128xbf16, #tpu.memory_space<vmem>>, vector<32x128xbf16>,
    return
  }
}

module attributes {stable_mosaic.version = 11 : i64} {
  func.func @_fused_final_kernel(%arg0: memref<64x512xbf16, #tpu.memory_space<vmem>>, %arg1: memref<512x32xbf16, #tpu.memory_space<vmem>>, %arg2: memref<64x1xf32, #tpu.memory_space<vmem>>, %arg3: memref<64x1xf32, #tpu.memory_space<vmem>>, %arg4: memref<64x32xf32, #tpu.memory_space<vmem>>, %arg5: memref<32x2xf32, #tpu.memory_space<vmem>>, %arg6: memref<1x2xf32, #tpu.memory_space<vmem>>) attributes {dimension_semantics = [], scalar_prefetch = 0 : i64, scratch_operands = 0 : i64, tpu.core_type = #tpu.core_type<tc>} {
    %c0 = arith.constant 0 : index
    %c0_0 = arith.constant 0 : index
    %0 = vector.load %arg0[%c0, %c0_0] : memref<64x512xbf16, #tpu.memory_space<vmem>>, vector<64x512xbf16>
    %c0_1 = arith.constant 0 : index
    %c0_2 = arith.constant 0 : index
    %1 = vector.load %arg1[%c0_1, %c0_2] : memref<512x32xbf16, #tpu.memory_space<vmem>>, vector<512x32xbf16>
    %cst = arith.constant dense<0.000000e+00> : vector<64x32xf32>
    %2 = tpu.matmul %0, %1, %cst {dimension_numbers = #tpu.dot_dimension_numbers<[1], [0], [0], [1], [0, 0, 1, 1], [], []>} : vector<64x512xbf16>, vector<512x32xbf16>, vector<64x32xf32> -> vector<64x32xf32>
    %cst_3 = arith.constant dense<0.000000e+00> : vector<64xf32>
    %3 = vector.multi_reduction <add>, %2, %cst_3 [1] : vector<64x32xf32> to vector<64xf32>
    %4 = vector.shape_cast %3 : vector<64xf32> to vector<64x1xf32>
    %cst_4 = arith.constant 3.200000e+01 : f32
    %5 = vector.broadcast %cst_4 : f32 to vector<64x1xf32>
    %6 = arith.divf %4, %5 : vector<64x1xf32>
    %7 = arith.mulf %2, %2 : vector<64x32xf32>
    %cst_5 = arith.constant dense<0.000000e+00> : vector<64xf32>
    %8 = vector.multi_reduction <add>, %7, %cst_5 [1] : vector<64x32xf32> to vector<64xf32>
    %9 = vector.shape_cast %8 : vector<64xf32> to vector<64x1xf32>
    %cst_6 = arith.constant 3.200000e+01 : f32
    %10 = vector.broadcast %cst_6 : f32 to vector<64x1xf32>
    %11 = arith.divf %9, %10 : vector<64x1xf32>
    %12 = arith.mulf %6, %6 : vector<64x1xf32>
    %13 = arith.subf %11, %12 : vector<64x1xf32>
    %cst_7 = arith.constant 9.99999974E-6 : f32
    %14 = vector.broadcast %cst_7 : f32 to vector<64x1xf32>
    %15 = arith.addf %13, %14 : vector<64x1xf32>
    %16 = math.rsqrt %15 : vector<64x1xf32>
    %c0_8 = arith.constant 0 : index
    %c0_9 = arith.constant 0 : index
    %17 = vector.load %arg2[%c0_8, %c0_9] : memref<64x1xf32, #tpu.memory_space<vmem>>, vector<64x1xf32>
    %18 = arith.mulf %17, %16 : vector<64x1xf32>
    %c0_10 = arith.constant 0 : index
    %c0_11 = arith.constant 0 : index
    %19 = vector.load %arg3[%c0_10, %c0_11] : memref<64x1xf32, #tpu.memory_space<vmem>>, vector<64x1xf32>
    %20 = arith.mulf %6, %18 : vector<64x1xf32>
    %21 = arith.subf %19, %20 : vector<64x1xf32>
    %22 = vector.broadcast %18 : vector<64x1xf32> to vector<64x32xf32>
    %23 = arith.mulf %2, %22 : vector<64x32xf32>
    %24 = vector.broadcast %21 : vector<64x1xf32> to vector<64x32xf32>
    %25 = arith.addf %23, %24 : vector<64x32xf32>
    %cst_12 = arith.constant 0.000000e+00 : f32
    %26 = vector.broadcast %cst_12 : f32 to vector<64x32xf32>
    %27 = arith.cmpf ogt, %25, %26 : vector<64x32xf32>
    %cst_13 = arith.constant 2.000000e-01 : f32
    %28 = vector.broadcast %cst_13 : f32 to vector<64x32xf32>
    %29 = arith.mulf %28, %25 : vector<64x32xf32>
    %30 = arith.select %27, %25, %29 : vector<64x32xi1>, vector<64x32xf32>
    %c0_14 = arith.constant 0 : index
    %c0_15 = arith.constant 0 : index
    %31 = vector.load %arg4[%c0_14, %c0_15] : memref<64x32xf32, #tpu.memory_space<vmem>>, vector<64x32xf32>
    %32 = arith.mulf %30, %31 : vector<64x32xf32>
    %c0_16 = arith.constant 0 : index
    %c0_17 = arith.constant 0 : index
    %33 = vector.load %arg5[%c0_16, %c0_17] : memref<32x2xf32, #tpu.memory_space<vmem>>, vector<32x2xf32>
    %cst_18 = arith.constant dense<0.000000e+00> : vector<64x2xf32>
    %34 = tpu.matmul %32, %33, %cst_18 {dimension_numbers = #tpu.dot_dimension_numbers<[1], [0], [0], [1], [0, 0, 1, 1], [], []>} : vector<64x32xf32>, vector<32x2xf32>, vector<64x2xf32> -> vector<64x2xf32>
    %cst_19 = arith.constant dense<0.000000e+00> : vector<2xf32>
    %35 = vector.multi_reduction <add>, %34, %cst_19 [0] : vector<64x2xf32> to vector<2xf32>
    %36 = vector.shape_cast %35 : vector<2xf32> to vector<1x2xf32>
    %cst_20 = arith.constant 0.000000e+00 : f32
    %37 = vector.broadcast %cst_20 : f32 to vector<1x2xf32>
    %38 = arith.subf %37, %36 : vector<1x2xf32>
    %39 = math.exp %38 : vector<1x2xf32>
    %cst_21 = arith.constant 1.000000e+00 : f32
    %40 = vector.broadcast %cst_21 : f32 to vector<1x2xf32>
    %41 = arith.addf %40, %39 : vector<1x2xf32>
    %cst_22 = arith.constant 1.000000e+00 : f32
    %42 = vector.broadcast %cst_22 : f32 to vector<1x2xf32>
    %43 = arith.divf %42, %41 : vector<1x2xf32>
    %c0_23 = arith.constant 0 : index
    %c0_24 = arith.constant 0 : index
    %44 = vector.load %arg6[%c0_23, %c0_24] : memref<1x2xf32, #tpu.memory_space<vmem>>, vector<1x2xf32>
    tpu.vector_store %arg6[%c0_23, %c0_24], %43 {strides = array<i32>} : memref<1x2xf32, #tpu.memory_space<vmem>>, vector<1x2xf32>,
    return
  }
}

</mosaic_0001>

<llo_original>
// kernel: netd_forward.4
$region0: #{netd_forward.4}
  #allocation0 [shape = 'u32[]', space=smem, size = 0x4, offset = 0x4, fixed_abs, tag = 'smem constant byte address 0x4 - core index']
  #allocation1 [shape = 'u32[144,128]{1,0:T(1,128)}', space=vmem, size = 0x12000, scoped, tag = 'internal scratch']
  %s0 = inlined_call_operand.vmem [shape: bf16[8,16], index: 0, kind: input, shape index: {}]
  %s1 = inlined_call_operand.vmem [shape: bf16[16,2048], index: 1, kind: input, shape index: {}]
  %s2 = inlined_call_operand.vmem [shape: f32[8,1], index: 2, kind: input, shape index: {}]
  %s3 = inlined_call_operand.vmem [shape: f32[8,1], index: 3, kind: input, shape index: {}]
  %s4 = inlined_call_operand.vmem [shape: bf16[8,2048], index: 4, kind: output, shape index: {}]
  %s5 = sld [smem:[#allocation0]]
  $region26: #{netd_forward.4} parent=0
    _
  %s7 = ssub.s32 1, %s5
  %s8 = scalar_select 0, %s7, %s5
  // Predicated region
  $region2: #{netd_forward.4} parent=0 // pred_check
    _
  $region3: #{netd_forward.4} parent=0 // pred_check_branch
    %10 = sbr.rel (0) target = $region5
  $region4: #{netd_forward.4} parent=0 // pred_region
    _
  $region5: #{netd_forward.4} parent=0 // pred_fallthru
    _
  // Predicated region
  $region6: #{netd_forward.4} parent=0 // pred_check
    _
  $region7: #{netd_forward.4} parent=0 // pred_check_branch
    %12 = sbr.rel (0) target = $region9
  $region8: #{netd_forward.4} parent=0 // pred_region
    _
  $region9: #{netd_forward.4} parent=0 // pred_fallthru
    _
  // Predicated region
  $region10: #{netd_forward.4} parent=0 // pred_check
    _
  $region11: #{netd_forward.4} parent=0 // pred_check_branch
    %14 = sbr.rel (0) target = $region13
  $region12: #{netd_forward.4} parent=0 // pred_region
    _
  $region13: #{netd_forward.4} parent=0 // pred_fallthru
    _
  // Predicated region
  $region14: #{netd_forward.4} parent=0 // pred_check
    _
  $region15: #{netd_forward.4} parent=0 // pred_check_branch
    %16 = sbr.rel (0) target = $region17
  $region16: #{netd_forward.4} parent=0 // pred_region
    _
  $region17: #{netd_forward.4} parent=0 // pred_fallthru
    _
  %v18 = vld [vmem:[%s0] sm:$0xf]
  %v19 = vld [vmem:[%s1] sm:$0xff]
  %v20 = vld [vmem:[%s1 + $0x8] sm:$0xff]
  %v21 = vld [vmem:[%s1 + $0x10] sm:$0xff]
  %v22 = vld [vmem:[%s1 + $0x18] sm:$0xff]
  %v23 = vld [vmem:[%s1 + $0x20] sm:$0xff]
  %v24 = vld [vmem:[%s1 + $0x28] sm:$0xff]
  %v25 = vld [vmem:[%s1 + $0x30] sm:$0xff]
  %v26 = vld [vmem:[%s1 + $0x38] sm:$0xff]
  %v27 = vld [vmem:[%s1 + $0x40] sm:$0xff]
  %v28 = vld [vmem:[%s1 + $0x48] sm:$0xff]
  %v29 = vld [vmem:[%s1 + $0x50] sm:$0xff]
  %v30 = vld [vmem:[%s1 + $0x58] sm:$0xff]
  %v31 = vld [vmem:[%s1 + $0x60] sm:$0xff]
  %v32 = vld [vmem:[%s1 + $0x68] sm:$0xff]
  %v33 = vld [vmem:[%s1 + $0x70] sm:$0xff]
  %v34 = vld [vmem:[%s1 + $0x78] sm:$0xff]
  %v51 = vunpack.c.l.b16 %v19
  %v52 = vunpack.c.h.b16 %v19
  %v53 = vunpack.c.l.b16 %v20
  %v54 = vunpack.c.h.b16 %v20
  %v55 = vunpack.c.l.b16 %v21
  %v56 = vunpack.c.h.b16 %v21
  %v57 = vunpack.c.l.b16 %v22
  %v58 = vunpack.c.h.b16 %v22
  %v59 = vunpack.c.l.b16 %v23
  %v60 = vunpack.c.h.b16 %v23
  %v61 = vunpack.c.l.b16 %v24
  %v62 = vunpack.c.h.b16 %v24
  %v63 = vunpack.c.l.b16 %v25
  %v64 = vunpack.c.h.b16 %v25
  %v65 = vunpack.c.l.b16 %v26
  %v66 = vunpack.c.h.b16 %v26
  %v67 = vunpack.c.l.b16 %v27
  %v68 = vunpack.c.h.b16 %v27
  %v69 = vunpack.c.l.b16 %v28
  %v70 = vunpack.c.h.b16 %v28
  %v71 = vunpack.c.l.b16 %v29
  %v72 = vunpack.c.h.b16 %v29
  %v73 = vunpack.c.l.b16 %v30
  %v74 = vunpack.c.h.b16 %v30
  %v75 = vunpack.c.l.b16 %v31
  %v76 = vunpack.c.h.b16 %v31
  %v77 = vunpack.c.l.b16 %v32
  %v78 = vunpack.c.h.b16 %v32
  %v79 = vunpack.c.l.b16 %v33
  %v80 = vunpack.c.h.b16 %v33
  %v81 = vunpack.c.l.b16 %v34
  %v82 = vunpack.c.h.b16 %v34
  %v83 = vpack.c.b16 %v67, %v51
  %v84 = vpack.c.b16 %v68, %v52
  %v85 = vpack.c.b16 %v69, %v53
  %v86 = vpack.c.b16 %v70, %v54
  %v87 = vpack.c.b16 %v71, %v55
  %v88 = vpack.c.b16 %v72, %v56
  %v89 = vpack.c.b16 %v73, %v57
  %v90 = vpack.c.b16 %v74, %v58
  %v91 = vpack.c.b16 %v75, %v59
  %v92 = vpack.c.b16 %v76, %v60
  %v93 = vpack.c.b16 %v77, %v61
  %v94 = vpack.c.b16 %v78, %v62
  %v95 = vpack.c.b16 %v79, %v63
  %v96 = vpack.c.b16 %v80, %v64
  %v97 = vpack.c.b16 %v81, %v65
  %v98 = vpack.c.b16 %v82, %v66
  %vm115 = vcmask 130048
  %v117 = vsel %vm115, %v18, 0
  %119 = vmatprep.subr.bf16.mxu0 %v84
  %120 = vmatpush1.bf16.msra.mxu0 %v83
  %121 = vmatprep.subr.bf16.mxu0 0
  %122 = vmatpush1.bf16.msra.mxu0 0
  %123 = vmatprep.subr.bf16.mxu0 0
  %124 = vmatpush1.bf16.msra.mxu0 0
  %125 = vmatprep.subr.bf16.mxu0 0
  %126 = vmatpush1.bf16.msra.mxu0 0
  %127 = vmatprep.subr.bf16.mxu0 0
  %128 = vmatpush1.bf16.msra.mxu0 0
  %129 = vmatprep.subr.bf16.mxu0 0
  %130 = vmatpush1.bf16.msra.mxu0 0
  %131 = vmatprep.subr.bf16.mxu0 0
  %132 = vmatpush1.bf16.msra.mxu0 0
  %133 = vmatprep.subr.bf16.mxu0 0
  %134 = vmatpush1.bf16.msra.mxu0 0
  %135 = vmatprep.subr.bf16.mxu0 0
  %136 = vmatpush1.bf16.msra.mxu0 0
  %137 = vmatprep.subr.bf16.mxu0 0
  %138 = vmatpush1.bf16.msra.mxu0 0
  %139 = vmatprep.subr.bf16.mxu0 0
  %140 = vmatpush1.bf16.msra.mxu0 0
  %141 = vmatprep.subr.bf16.mxu0 0
  %142 = vmatpush1.bf16.msra.mxu0 0
  %143 = vmatprep.subr.bf16.mxu0 0
  %144 = vmatpush1.bf16.msra.mxu0 0
  %145 = vmatprep.subr.bf16.mxu0 0
  %146 = vmatpush1.bf16.msra.mxu0 0
  %147 = vmatprep.subr.bf16.mxu0 0
  %148 = vmatpush1.bf16.msra.mxu0 0
  %149 = vmatprep.subr.bf16.mxu0 0
  %150 = vmatpush1.bf16.msra.mxu0 0
  %151 = vmatprep.mubr.bf16.mxu0 0
  %152 = vmatmul.mubr.bf16.gmra.mrb[0].mxu0 %v117
  %v153 = vpop.f32.mrb[0].mxu0
  %v154 = vadd.f32 0.0, %v153
  %v155 = vpop.f32.mrb[0].mxu0
  %v156 = vadd.f32 0.0, %v155
  %v157 = vpop.f32.mrb[0].mxu0
  %v158 = vpop.f32.mrb[0].mxu0
  %159 = vdwg.mxu0
  %160 = vmatprep.subr.bf16.mxu0 %v86
  %161 = vmatpush1.bf16.msra.mxu0 %v85
  %162 = vmatprep.subr.bf16.mxu0 0
  %163 = vmatpush1.bf16.msra.mxu0 0
  %164 = vmatprep.subr.bf16.mxu0 0
  %165 = vmatpush1.bf16.msra.mxu0 0
  %166 = vmatprep.subr.bf16.mxu0 0
  %167 = vmatpush1.bf16.msra.mxu0 0
  %168 = vmatprep.subr.bf16.mxu0 0
  %169 = vmatpush1.bf16.msra.mxu0 0
  %170 = vmatprep.subr.bf16.mxu0 0
  %171 = vmatpush1.bf16.msra.mxu0 0
  %172 = vmatprep.subr.bf16.mxu0 0
  %173 = vmatpush1.bf16.msra.mxu0 0
  %174 = vmatprep.subr.bf16.mxu0 0
  %175 = vmatpush1.bf16.msra.mxu0 0
  %176 = vmatprep.subr.bf16.mxu0 0
  %177 = vmatpush1.bf16.msra.mxu0 0
  %178 = vmatprep.subr.bf16.mxu0 0
  %179 = vmatpush1.bf16.msra.mxu0 0
  %180 = vmatprep.subr.bf16.mxu0 0
  %181 = vmatpush1.bf16.msra.mxu0 0
  %182 = vmatprep.subr.bf16.mxu0 0
  %183 = vmatpush1.bf16.msra.mxu0 0
  %184 = vmatprep.subr.bf16.mxu0 0
  %185 = vmatpush1.bf16.msra.mxu0 0
  %186 = vmatprep.subr.bf16.mxu0 0
  %187 = vmatpush1.bf16.msra.mxu0 0
  %188 = vmatprep.subr.bf16.mxu0 0
  %189 = vmatpush1.bf16.msra.mxu0 0
  %190 = vmatprep.subr.bf16.mxu0 0
  %191 = vmatpush1.bf16.msra.mxu0 0
  %192 = vmatprep.mubr.bf16.mxu0 0
  %193 = vmatmul.mubr.bf16.gmra.mrb[0].mxu0 %v117
  %v194 = vpop.f32.mrb[0].mxu0
  %v195 = vadd.f32 0.0, %v194
  %v196 = vpop.f32.mrb[0].mxu0
  %v197 = vadd.f32 0.0, %v196
  %v198 = vpop.f32.mrb[0].mxu0
  %v199 = vpop.f32.mrb[0].mxu0
  %200 = vdwg.mxu0
  %201 = vmatprep.subr.bf16.mxu0 %v88
  %202 = vmatpush1.bf16.msra.mxu0 %v87
  %203 = vmatprep.subr.bf16.mxu0 0
  %204 = vmatpush1.bf16.msra.mxu0 0
  %205 = vmatprep.subr.bf16.mxu0 0
  %206 = vmatpush1.bf16.msra.mxu0 0
  %207 = vmatprep.subr.bf16.mxu0 0
  %208 = vmatpush1.bf16.msra.mxu0 0
  %209 = vmatprep.subr.bf16.mxu0 0
  %210 = vmatpush1.bf16.msra.mxu0 0
  %211 = vmatprep.subr.bf16.mxu0 0
  %212 = vmatpush1.bf16.msra.mxu0 0
  %213 = vmatprep.subr.bf16.mxu0 0
  %214 = vmatpush1.bf16.msra.mxu0 0
  %215 = vmatprep.subr.bf16.mxu0 0
  %216 = vmatpush1.bf16.msra.mxu0 0
  %217 = vmatprep.subr.bf16.mxu0 0
  %218 = vmatpush1.bf16.msra.mxu0 0
  %219 = vmatprep.subr.bf16.mxu0 0
  %220 = vmatpush1.bf16.msra.mxu0 0
  %221 = vmatprep.subr.bf16.mxu0 0
  %222 = vmatpush1.bf16.msra.mxu0 0
  %223 = vmatprep.subr.bf16.mxu0 0
  %224 = vmatpush1.bf16.msra.mxu0 0
  %225 = vmatprep.subr.bf16.mxu0 0
  %226 = vmatpush1.bf16.msra.mxu0 0
  %227 = vmatprep.subr.bf16.mxu0 0
  %228 = vmatpush1.bf16.msra.mxu0 0
  %229 = vmatprep.subr.bf16.mxu0 0
  %230 = vmatpush1.bf16.msra.mxu0 0
  %231 = vmatprep.subr.bf16.mxu0 0
  %232 = vmatpush1.bf16.msra.mxu0 0
  %233 = vmatprep.mubr.bf16.mxu0 0
  %234 = vmatmul.mubr.bf16.gmra.mrb[0].mxu0 %v117
  %v235 = vpop.f32.mrb[0].mxu0
  %v236 = vadd.f32 0.0, %v235
  %v237 = vpop.f32.mrb[0].mxu0
  %v238 = vadd.f32 0.0, %v237
  %v239 = vpop.f32.mrb[0].mxu0
  %v240 = vpop.f32.mrb[0].mxu0
  %241 = vdwg.mxu0
  %242 = vmatprep.subr.bf16.mxu0 %v90
  %243 = vmatpush1.bf16.msra.mxu0 %v89
  %244 = vmatprep.subr.bf16.mxu0 0
  %245 = vmatpush1.bf16.msra.mxu0 0
  %246 = vmatprep.subr.bf16.mxu0 0
  %247 = vmatpush1.bf16.msra.mxu0 0
  %248 = vmatprep.subr.bf16.mxu0 0
  %249 = vmatpush1.bf16.msra.mxu0 0
  %250 = vmatprep.subr.bf16.mxu0 0
  %251 = vmatpush1.bf16.msra.mxu0 0
  %252 = vmatprep.subr.bf16.mxu0 0
  %253 = vmatpush1.bf16.msra.mxu0 0
  %254 = vmatprep.subr.bf16.mxu0 0
  %255 = vmatpush1.bf16.msra.mxu0 0
  %256 = vmatprep.subr.bf16.mxu0 0
  %257 = vmatpush1.bf16.msra.mxu0 0
  %258 = vmatprep.subr.bf16.mxu0 0
  %259 = vmatpush1.bf16.msra.mxu0 0
  %260 = vmatprep.subr.bf16.mxu0 0
  %261 = vmatpush1.bf16.msra.mxu0 0
  %262 = vmatprep.subr.bf16.mxu0 0
  %263 = vmatpush1.bf16.msra.mxu0 0
  %264 = vmatprep.subr.bf16.mxu0 0
  %265 = vmatpush1.bf16.msra.mxu0 0
  %266 = vmatprep.subr.bf16.mxu0 0
  %267 = vmatpush1.bf16.msra.mxu0 0
  %268 = vmatprep.subr.bf16.mxu0 0
  %269 = vmatpush1.bf16.msra.mxu0 0
  %270 = vmatprep.subr.bf16.mxu0 0
  %271 = vmatpush1.bf16.msra.mxu0 0
  %272 = vmatprep.subr.bf16.mxu0 0
  %273 = vmatpush1.bf16.msra.mxu0 0
  %274 = vmatprep.mubr.bf16.mxu0 0
  %275 = vmatmul.mubr.bf16.gmra.mrb[0].mxu0 %v117
  %v276 = vpop.f32.mrb[0].mxu0
  %v277 = vadd.f32 0.0, %v276
  %v278 = vpop.f32.mrb[0].mxu0
  %v279 = vadd.f32 0.0, %v278
  %v280 = vpop.f32.mrb[0].mxu0
  %v281 = vpop.f32.mrb[0].mxu0
  %282 = vdwg.mxu0
  %283 = vmatprep.subr.bf16.mxu0 %v92
  %284 = vmatpush1.bf16.msra.mxu0 %v91
  %285 = vmatprep.subr.bf16.mxu0 0
  %286 = vmatpush1.bf16.msra.mxu0 0
  %287 = vmatprep.subr.bf16.mxu0 0
  %288 = vmatpush1.bf16.msra.mxu0 0
  %289 = vmatprep.subr.bf16.mxu0 0
  %290 = vmatpush1.bf16.msra.mxu0 0
  %291 = vmatprep.subr.bf16.mxu0 0
  %292 = vmatpush1.bf16.msra.mxu0 0
  %293 = vmatprep.subr.bf16.mxu0 0
  %294 = vmatpush1.bf16.msra.mxu0 0
  %295 = vmatprep.subr.bf16.mxu0 0
  %296 = vmatpush1.bf16.msra.mxu0 0
  %297 = vmatprep.subr.bf16.mxu0 0
  %298 = vmatpush1.bf16.msra.mxu0 0
  %299 = vmatprep.subr.bf16.mxu0 0
  %300 = vmatpush1.bf16.msra.mxu0 0
  %301 = vmatprep.subr.bf16.mxu0 0
  %302 = vmatpush1.bf16.msra.mxu0 0
  %303 = vmatprep.subr.bf16.mxu0 0
  %304 = vmatpush1.bf16.msra.mxu0 0
  %305 = vmatprep.subr.bf16.mxu0 0
  %306 = vmatpush1.bf16.msra.mxu0 0
  %307 = vmatprep.subr.bf16.mxu0 0
  %308 = vmatpush1.bf16.msra.mxu0 0
  %309 = vmatprep.subr.bf16.mxu0 0
  %310 = vmatpush1.bf16.msra.mxu0 0
  %311 = vmatprep.subr.bf16.mxu0 0
  %312 = vmatpush1.bf16.msra.mxu0 0
  %313 = vmatprep.subr.bf16.mxu0 0
  %314 = vmatpush1.bf16.msra.mxu0 0
  %315 = vmatprep.mubr.bf16.mxu0 0
  %316 = vmatmul.mubr.bf16.gmra.mrb[0].mxu0 %v117
  %v317 = vpop.f32.mrb[0].mxu0
  %v318 = vadd.f32 0.0, %v317
  %v319 = vpop.f32.mrb[0].mxu0
  %v320 = vadd.f32 0.0, %v319
  %v321 = vpop.f32.mrb[0].mxu0
  %v322 = vpop.f32.mrb[0].mxu0
  %323 = vdwg.mxu0
  %324 = vmatprep.subr.bf16.mxu0 %v94
  %325 = vmatpush1.bf16.msra.mxu0 %v93
  %326 = vmatprep.subr.bf16.mxu0 0
  %327 = vmatpush1.bf16.msra.mxu0 0
  %328 = vmatprep.subr.bf16.mxu0 0
  %329 = vmatpush1.bf16.msra.mxu0 0
  %330 = vmatprep.subr.bf16.mxu0 0
  %331 = vmatpush1.bf16.msra.mxu0 0
  %332 = vmatprep.subr.bf16.mxu0 0
  %333 = vmatpush1.bf16.msra.mxu0 0
  %334 = vmatprep.subr.bf16.mxu0 0
  %335 = vmatpush1.bf16.msra.mxu0 0
  %336 = vmatprep.subr.bf16.mxu0 0
  %337 = vmatpush1.bf16.msra.mxu0 0
  %338 = vmatprep.subr.bf16.mxu0 0
  %339 = vmatpush1.bf16.msra.mxu0 0
  %340 = vmatprep.subr.bf16.mxu0 0
  %341 = vmatpush1.bf16.msra.mxu0 0
  %342 = vmatprep.subr.bf16.mxu0 0
  %343 = vmatpush1.bf16.msra.mxu0 0
  %344 = vmatprep.subr.bf16.mxu0 0
  %345 = vmatpush1.bf16.msra.mxu0 0
  %346 = vmatprep.subr.bf16.mxu0 0
  %347 = vmatpush1.bf16.msra.mxu0 0
  %348 = vmatprep.subr.bf16.mxu0 0
  %349 = vmatpush1.bf16.msra.mxu0 0
  %350 = vmatprep.subr.bf16.mxu0 0
  %351 = vmatpush1.bf16.msra.mxu0 0
  %352 = vmatprep.subr.bf16.mxu0 0
  %353 = vmatpush1.bf16.msra.mxu0 0
  %354 = vmatprep.subr.bf16.mxu0 0
  %355 = vmatpush1.bf16.msra.mxu0 0
  %356 = vmatprep.mubr.bf16.mxu0 0
  %357 = vmatmul.mubr.bf16.gmra.mrb[0].mxu0 %v117
  %v358 = vpop.f32.mrb[0].mxu0
  %v359 = vadd.f32 0.0, %v358
  %v360 = vpop.f32.mrb[0].mxu0
  %v361 = vadd.f32 0.0, %v360
  %v362 = vpop.f32.mrb[0].mxu0
  %v363 = vpop.f32.mrb[0].mxu0
  %364 = vdwg.mxu0
  %365 = vmatprep.subr.bf16.mxu0 %v96
  %366 = vmatpush1.bf16.msra.mxu0 %v95
  %367 = vmatprep.subr.bf16.mxu0 0
  %368 = vmatpush1.bf16.msra.mxu0 0
  %369 = vmatprep.subr.bf16.mxu0 0
  %370 = vmatpush1.bf16.msra.mxu0 0
  %371 = vmatprep.subr.bf16.mxu0 0
  %372 = vmatpush1.bf16.msra.mxu0 0
  %373 = vmatprep.subr.bf16.mxu0 0
  %374 = vmatpush1.bf16.msra.mxu0 0
  %375 = vmatprep.subr.bf16.mxu0 0
  %376 = vmatpush1.bf16.msra.mxu0 0
  %377 = vmatprep.subr.bf16.mxu0 0
  %378 = vmatpush1.bf16.msra.mxu0 0
  %379 = vmatprep.subr.bf16.mxu0 0
  %380 = vmatpush1.bf16.msra.mxu0 0
  %381 = vmatprep.subr.bf16.mxu0 0
  %382 = vmatpush1.bf16.msra.mxu0 0
  %383 = vmatprep.subr.bf16.mxu0 0
  %384 = vmatpush1.bf16.msra.mxu0 0
  %385 = vmatprep.subr.bf16.mxu0 0
  %386 = vmatpush1.bf16.msra.mxu0 0
  %387 = vmatprep.subr.bf16.mxu0 0
  %388 = vmatpush1.bf16.msra.mxu0 0
  %389 = vmatprep.subr.bf16.mxu0 0
  %390 = vmatpush1.bf16.msra.mxu0 0
  %391 = vmatprep.subr.bf16.mxu0 0
  %392 = vmatpush1.bf16.msra.mxu0 0
  %393 = vmatprep.subr.bf16.mxu0 0
  %394 = vmatpush1.bf16.msra.mxu0 0
  %395 = vmatprep.subr.bf16.mxu0 0
  %396 = vmatpush1.bf16.msra.mxu0 0
  %397 = vmatprep.mubr.bf16.mxu0 0
  %398 = vmatmul.mubr.bf16.gmra.mrb[0].mxu0 %v117
  %v399 = vpop.f32.mrb[0].mxu0
  %v400 = vadd.f32 0.0, %v399
  %v401 = vpop.f32.mrb[0].mxu0
  %v402 = vadd.f32 0.0, %v401
  %v403 = vpop.f32.mrb[0].mxu0
  %v404 = vpop.f32.mrb[0].mxu0
  %405 = vdwg.mxu0
  %406 = vmatprep.subr.bf16.mxu0 %v98
  %407 = vmatpush1.bf16.msra.mxu0 %v97
  %408 = vmatprep.subr.bf16.mxu0 0
  %409 = vmatpush1.bf16.msra.mxu0 0
  %410 = vmatprep.subr.bf16.mxu0 0
  %411 = vmatpush1.bf16.msra.mxu0 0
  %412 = vmatprep.subr.bf16.mxu0 0
  %413 = vmatpush1.bf16.msra.mxu0 0
  %414 = vmatprep.subr.bf16.mxu0 0
  %415 = vmatpush1.bf16.msra.mxu0 0
  %416 = vmatprep.subr.bf16.mxu0 0
  %417 = vmatpush1.bf16.msra.mxu0 0
  %418 = vmatprep.subr.bf16.mxu0 0
  %419 = vmatpush1.bf16.msra.mxu0 0
  %420 = vmatprep.subr.bf16.mxu0 0
  %421 = vmatpush1.bf16.msra.mxu0 0
  %422 = vmatprep.subr.bf16.mxu0 0
  %423 = vmatpush1.bf16.msra.mxu0 0
  %424 = vmatprep.subr.bf16.mxu0 0
  %425 = vmatpush1.bf16.msra.mxu0 0
  %426 = vmatprep.subr.bf16.mxu0 0
  %427 = vmatpush1.bf16.msra.mxu0 0
  %428 = vmatprep.subr.bf16.mxu0 0
  %429 = vmatpush1.bf16.msra.mxu0 0
  %430 = vmatprep.subr.bf16.mxu0 0
  %431 = vmatpush1.bf16.msra.mxu0 0
  %432 = vmatprep.subr.bf16.mxu0 0
  %433 = vmatpush1.bf16.msra.mxu0 0
  %434 = vmatprep.subr.bf16.mxu0 0
  %435 = vmatpush1.bf16.msra.mxu0 0
  %436 = vmatprep.subr.bf16.mxu0 0
  %437 = vmatpush1.bf16.msra.mxu0 0
  %438 = vmatprep.mubr.bf16.mxu0 0
  %439 = vmatmul.mubr.bf16.gmra.mrb[0].mxu0 %v117
  %v440 = vpop.f32.mrb[0].mxu0
  %v441 = vadd.f32 0.0, %v440
  %v442 = vpop.f32.mrb[0].mxu0
  %v443 = vadd.f32 0.0, %v442
  %v444 = vpop.f32.mrb[0].mxu0
  %v445 = vpop.f32.mrb[0].mxu0
  %446 = vdwg.mxu0
  %v447 = vadd.f32 %v154, %v156
  %v448 = vadd.f32 %v447, %v195
  %v449 = vadd.f32 %v448, %v197
  %v450 = vadd.f32 %v449, %v236
  %v451 = vadd.f32 %v450, %v238
  %v452 = vadd.f32 %v451, %v277
  %v453 = vadd.f32 %v452, %v279
  %v454 = vadd.f32 %v453, %v318
  %v455 = vadd.f32 %v454, %v320
  %v456 = vadd.f32 %v455, %v359
  %v457 = vadd.f32 %v456, %v361
  %v458 = vadd.f32 %v457, %v400
  %v459 = vadd.f32 %v458, %v402
  %v460 = vadd.f32 %v459, %v441
  %v461 = vadd.f32 %v460, %v443
  %462 = vadd.xlane.f32.xlu0 %v461
  %v463 = vpop.xlane.xlu0 %462
  %v464 = vrcp.pop 2048.0
  %v465 = vmul.f32 %v463, %v464
  %v466 = vmul.f32 %v154, %v154
  %v467 = vmul.f32 %v156, %v156
  %v468 = vmul.f32 %v195, %v195
  %v469 = vmul.f32 %v197, %v197
  %v470 = vmul.f32 %v236, %v236
  %v471 = vmul.f32 %v238, %v238
  %v472 = vmul.f32 %v277, %v277
  %v473 = vmul.f32 %v279, %v279
  %v474 = vmul.f32 %v318, %v318
  %v475 = vmul.f32 %v320, %v320
  %v476 = vmul.f32 %v359, %v359
  %v477 = vmul.f32 %v361, %v361
  %v478 = vmul.f32 %v400, %v400
  %v479 = vmul.f32 %v402, %v402
  %v480 = vmul.f32 %v441, %v441
  %v481 = vmul.f32 %v443, %v443
  %v482 = vadd.f32 %v466, %v467
  %v483 = vadd.f32 %v482, %v468
  %v484 = vadd.f32 %v483, %v469
  %v485 = vadd.f32 %v484, %v470
  %v486 = vadd.f32 %v485, %v471
  %v487 = vadd.f32 %v486, %v472
  %v488 = vadd.f32 %v487, %v473
  %v489 = vadd.f32 %v488, %v474
  %v490 = vadd.f32 %v489, %v475
  %v491 = vadd.f32 %v490, %v476
  %v492 = vadd.f32 %v491, %v477
  %v493 = vadd.f32 %v492, %v478
  %v494 = vadd.f32 %v493, %v479
  %v495 = vadd.f32 %v494, %v480
  %v496 = vadd.f32 %v495, %v481
  %497 = vadd.xlane.f32.xlu0 %v496
  %v498 = vpop.xlane.xlu0 %497
  %v499 = vmul.f32 %v498, %v464
  %v500 = vmul.f32 %v465, %v465
  %v501 = vsub.f32 %v499, %v500
  %v502 = vadd.f32 %v501, 1e-05
  %v503 = vrsqrt.pop %v502
  %v504 = vld [vmem:[%s2] sm:$0xff]
  %v505 = vmul.f32 %v504, %v503
  %v506 = vld [vmem:[%s3] sm:$0xff]
  %v507 = vmul.f32 %v465, %v505
  %v508 = vsub.f32 %v506, %v507
  %510 = vset.pattern.permute.xlu0 0
  %511 = vperm.xlu0 %510, %v505
  %v512 = vpop.permute.xlu0 %511
  %v514 = vmul.f32 %v154, %v512
  %v515 = vmul.f32 %v156, %v512
  %v516 = vmul.f32 %v195, %v512
  %v517 = vmul.f32 %v197, %v512
  %v518 = vmul.f32 %v236, %v512
  %v519 = vmul.f32 %v238, %v512
  %v520 = vmul.f32 %v277, %v512
  %v521 = vmul.f32 %v279, %v512
  %v522 = vmul.f32 %v318, %v512
  %v523 = vmul.f32 %v320, %v512
  %v524 = vmul.f32 %v359, %v512
  %v525 = vmul.f32 %v361, %v512
  %v526 = vmul.f32 %v400, %v512
  %v527 = vmul.f32 %v402, %v512
  %v528 = vmul.f32 %v441, %v512
  %v529 = vmul.f32 %v443, %v512
  %531 = vset.pattern.permute.xlu0 0
  %532 = vperm.xlu0 %531, %v508
  %v533 = vpop.permute.xlu0 %532
  %v535 = vadd.f32 %v514, %v533
  %v536 = vadd.f32 %v515, %v533
  %v537 = vadd.f32 %v516, %v533
  %v538 = vadd.f32 %v517, %v533
  %v539 = vadd.f32 %v518, %v533
  %v540 = vadd.f32 %v519, %v533
  %v541 = vadd.f32 %v520, %v533
  %v542 = vadd.f32 %v521, %v533
  %v543 = vadd.f32 %v522, %v533
  %v544 = vadd.f32 %v523, %v533
  %v545 = vadd.f32 %v524, %v533
  %v546 = vadd.f32 %v525, %v533
  %v547 = vadd.f32 %v526, %v533
  %v548 = vadd.f32 %v527, %v533
  %v549 = vadd.f32 %v528, %v533
  %v550 = vadd.f32 %v529, %v533
  %vm551 = vcmp.gt.f32.partialorder %v535, 0.0
  %vm552 = vcmp.gt.f32.partialorder %v536, 0.0
  %vm553 = vcmp.gt.f32.partialorder %v537, 0.0
  %vm554 = vcmp.gt.f32.partialorder %v538, 0.0
  %vm555 = vcmp.gt.f32.partialorder %v539, 0.0
  %vm556 = vcmp.gt.f32.partialorder %v540, 0.0
  %vm557 = vcmp.gt.f32.partialorder %v541, 0.0
  %vm558 = vcmp.gt.f32.partialorder %v542, 0.0
  %vm559 = vcmp.gt.f32.partialorder %v543, 0.0
  %vm560 = vcmp.gt.f32.partialorder %v544, 0.0
  %vm561 = vcmp.gt.f32.partialorder %v545, 0.0
  %vm562 = vcmp.gt.f32.partialorder %v546, 0.0
  %vm563 = vcmp.gt.f32.partialorder %v547, 0.0
  %vm564 = vcmp.gt.f32.partialorder %v548, 0.0
  %vm565 = vcmp.gt.f32.partialorder %v549, 0.0
  %vm566 = vcmp.gt.f32.partialorder %v550, 0.0
  %v567 = vmul.f32 %v535, 0.2
  %v568 = vmul.f32 %v536, 0.2
  %v569 = vmul.f32 %v537, 0.2
  %v570 = vmul.f32 %v538, 0.2
  %v571 = vmul.f32 %v539, 0.2
  %v572 = vmul.f32 %v540, 0.2
  %v573 = vmul.f32 %v541, 0.2
  %v574 = vmul.f32 %v542, 0.2
  %v575 = vmul.f32 %v543, 0.2
  %v576 = vmul.f32 %v544, 0.2
  %v577 = vmul.f32 %v545, 0.2
  %v578 = vmul.f32 %v546, 0.2
  %v579 = vmul.f32 %v547, 0.2
  %v580 = vmul.f32 %v548, 0.2
  %v581 = vmul.f32 %v549, 0.2
  %v582 = vmul.f32 %v550, 0.2
  %v583 = vsel %vm551, %v535, %v567
  %v584 = vsel %vm552, %v536, %v568
  %v585 = vsel %vm553, %v537, %v569
  %v586 = vsel %vm554, %v538, %v570
  %v587 = vsel %vm555, %v539, %v571
  %v588 = vsel %vm556, %v540, %v572
  %v589 = vsel %vm557, %v541, %v573
  %v590 = vsel %vm558, %v542, %v574
  %v591 = vsel %vm559, %v543, %v575
  %v592 = vsel %vm560, %v544, %v576
  %v593 = vsel %vm561, %v545, %v577
  %v594 = vsel %vm562, %v546, %v578
  %v595 = vsel %vm563, %v547, %v579
  %v596 = vsel %vm564, %v548, %v580
  %v597 = vsel %vm565, %v549, %v581
  %v598 = vsel %vm566, %v550, %v582
  %v599 = vpack.c.bf16 %v583, %v583
  %v600 = vpack.c.bf16 %v584, %v584
  %v601 = vpack.c.bf16 %v585, %v585
  %v602 = vpack.c.bf16 %v586, %v586
  %v603 = vpack.c.bf16 %v587, %v587
  %v604 = vpack.c.bf16 %v588, %v588
  %v605 = vpack.c.bf16 %v589, %v589
  %v606 = vpack.c.bf16 %v590, %v590
  %v607 = vpack.c.bf16 %v591, %v591
  %v608 = vpack.c.bf16 %v592, %v592
  %v609 = vpack.c.bf16 %v593, %v593
  %v610 = vpack.c.bf16 %v594, %v594
  %v611 = vpack.c.bf16 %v595, %v595
  %v612 = vpack.c.bf16 %v596, %v596
  %v613 = vpack.c.bf16 %v597, %v597
  %v614 = vpack.c.bf16 %v598, %v598
  %v631 = vunpack.c.l.b16 %v599
  %v632 = vunpack.c.l.b16 %v600
  %v633 = vunpack.c.l.b16 %v601
  %v634 = vunpack.c.l.b16 %v602
  %v635 = vunpack.c.l.b16 %v603
  %v636 = vunpack.c.l.b16 %v604
  %v637 = vunpack.c.l.b16 %v605
  %v638 = vunpack.c.l.b16 %v606
  %v639 = vunpack.c.l.b16 %v607
  %v640 = vunpack.c.l.b16 %v608
  %v641 = vunpack.c.l.b16 %v609
  %v642 = vunpack.c.l.b16 %v610
  %v643 = vunpack.c.l.b16 %v611
  %v644 = vunpack.c.l.b16 %v612
  %v645 = vunpack.c.l.b16 %v613
  %v646 = vunpack.c.l.b16 %v614
  %v647 = vpack.c.b16 %v632, %v631
  %v648 = vpack.c.b16 %v634, %v633
  %v649 = vpack.c.b16 %v636, %v635
  %v650 = vpack.c.b16 %v638, %v637
  %v651 = vpack.c.b16 %v640, %v639
  %v652 = vpack.c.b16 %v642, %v641
  %v653 = vpack.c.b16 %v644, %v643
  %v654 = vpack.c.b16 %v646, %v645
  %663 = vst [vmem:[%s4] sm:$0xff] %v647
  %664 = vst [vmem:[%s4 + $0x8] sm:$0xff] %v648
  %665 = vst [vmem:[%s4 + $0x10] sm:$0xff] %v649
  %666 = vst [vmem:[%s4 + $0x18] sm:$0xff] %v650
  %667 = vst [vmem:[%s4 + $0x20] sm:$0xff] %v651
  %668 = vst [vmem:[%s4 + $0x28] sm:$0xff] %v652
  %669 = vst [vmem:[%s4 + $0x30] sm:$0xff] %v653
  %670 = vst [vmem:[%s4 + $0x38] sm:$0xff] %v654
  // Predicated region
  $region18: #{netd_forward.4} parent=0 // pred_check
    _
  $region19: #{netd_forward.4} parent=0 // pred_check_branch
    %672 = sbr.rel (0) target = $region21
  $region20: #{netd_forward.4} parent=0 // pred_region
    _
  $region21: #{netd_forward.4} parent=0 // pred_fallthru
    _
  // Predicated region
  $region22: #{netd_forward.4} parent=0 // pred_check
    _
  $region23: #{netd_forward.4} parent=0 // pred_check_branch
    %674 = sbr.rel (0) target = $region25
  $region24: #{netd_forward.4} parent=0 // pred_region
    _
  $region25: #{netd_forward.4} parent=0 // pred_fallthru
    _

// kernel: netd_forward.5
$region0: #{netd_forward.5}
  #allocation0 [shape = 'u32[]', space=smem, size = 0x4, offset = 0x4, fixed_abs, tag = 'smem constant byte address 0x4 - core index']
  #allocation1 [shape = 'u32[144,128]{1,0:T(1,128)}', space=vmem, size = 0x12000, scoped, tag = 'internal scratch']
  %s0 = inlined_call_operand.vmem [shape: bf16[16,128], index: 0, kind: input, shape index: {}]
  %s1 = inlined_call_operand.vmem [shape: bf16[128,512], index: 1, kind: input, shape index: {}]
  %s2 = inlined_call_operand.vmem [shape: f32[16,1], index: 2, kind: input, shape index: {}]
  %s3 = inlined_call_operand.vmem [shape: f32[16,1], index: 3, kind: input, shape index: {}]
  %s4 = inlined_call_operand.vmem [shape: bf16[16,512], index: 4, kind: output, shape index: {}]
  %s5 = sld [smem:[#allocation0]]
  $region26: #{netd_forward.5} parent=0
    _
  %s7 = ssub.s32 1, %s5
  %s8 = scalar_select 0, %s7, %s5
  // Predicated region
  $region2: #{netd_forward.5} parent=0 // pred_check
    _
  $region3: #{netd_forward.5} parent=0 // pred_check_branch
    %10 = sbr.rel (0) target = $region5
  $region4: #{netd_forward.5} parent=0 // pred_region
    _
  $region5: #{netd_forward.5} parent=0 // pred_fallthru
    _
  // Predicated region
  $region6: #{netd_forward.5} parent=0 // pred_check
    _
  $region7: #{netd_forward.5} parent=0 // pred_check_branch
    %12 = sbr.rel (0) target = $region9
  $region8: #{netd_forward.5} parent=0 // pred_region
    _
  $region9: #{netd_forward.5} parent=0 // pred_fallthru
    _
  // Predicated region
  $region10: #{netd_forward.5} parent=0 // pred_check
    _
  $region11: #{netd_forward.5} parent=0 // pred_check_branch
    %14 = sbr.rel (0) target = $region13
  $region12: #{netd_forward.5} parent=0 // pred_region
    _
  $region13: #{netd_forward.5} parent=0 // pred_fallthru
    _
  // Predicated region
  $region14: #{netd_forward.5} parent=0 // pred_check
    _
  $region15: #{netd_forward.5} parent=0 // pred_check_branch
    %16 = sbr.rel (0) target = $region17
  $region16: #{netd_forward.5} parent=0 // pred_region
    _
  $region17: #{netd_forward.5} parent=0 // pred_fallthru
    _
  %v18 = vld [vmem:[%s0] sm:$0xf]
  %v19 = vld [vmem:[%s0 + $0x4] sm:$0xf]
  %v20 = vld [vmem:[%s1] sm:$0xff]
  %v21 = vld [vmem:[%s1 + $0x8] sm:$0xff]
  %v22 = vld [vmem:[%s1 + $0x10] sm:$0xff]
  %v23 = vld [vmem:[%s1 + $0x18] sm:$0xff]
  %v24 = vld [vmem:[%s1 + $0x20] sm:$0xff]
  %v25 = vld [vmem:[%s1 + $0x28] sm:$0xff]
  %v26 = vld [vmem:[%s1 + $0x30] sm:$0xff]
  %v27 = vld [vmem:[%s1 + $0x38] sm:$0xff]
  %v28 = vld [vmem:[%s1 + $0x40] sm:$0xff]
  %v29 = vld [vmem:[%s1 + $0x48] sm:$0xff]
  %v30 = vld [vmem:[%s1 + $0x50] sm:$0xff]
  %v31 = vld [vmem:[%s1 + $0x58] sm:$0xff]
  %v32 = vld [vmem:[%s1 + $0x60] sm:$0xff]
  %v33 = vld [vmem:[%s1 + $0x68] sm:$0xff]
  %v34 = vld [vmem:[%s1 + $0x70] sm:$0xff]
  %v35 = vld [vmem:[%s1 + $0x78] sm:$0xff]
  %v36 = vld [vmem:[%s1 + $0x80] sm:$0xff]
  %v37 = vld [vmem:[%s1 + $0x88] sm:$0xff]
  %v38 = vld [vmem:[%s1 + $0x90] sm:$0xff]
  %v39 = vld [vmem:[%s1 + $0x98] sm:$0xff]
  %v40 = vld [vmem:[%s1 + $0xa0] sm:$0xff]
  %v41 = vld [vmem:[%s1 + $0xa8] sm:$0xff]
  %v42 = vld [vmem:[%s1 + $0xb0] sm:$0xff]
  %v43 = vld [vmem:[%s1 + $0xb8] sm:$0xff]
  %v44 = vld [vmem:[%s1 + $0xc0] sm:$0xff]
  %v45 = vld [vmem:[%s1 + $0xc8] sm:$0xff]
  %v46 = vld [vmem:[%s1 + $0xd0] sm:$0xff]
  %v47 = vld [vmem:[%s1 + $0xd8] sm:$0xff]
  %v48 = vld [vmem:[%s1 + $0xe0] sm:$0xff]
  %v49 = vld [vmem:[%s1 + $0xe8] sm:$0xff]
  %v50 = vld [vmem:[%s1 + $0xf0] sm:$0xff]
  %v51 = vld [vmem:[%s1 + $0xf8] sm:$0xff]
  %v54 = vunpack.c.l.b16 %v18
  %v55 = vunpack.c.l.b16 %v19
  %v56 = vpack.c.b16 %v55, %v54
  %v90 = vunpack.c.l.b16 %v20
  %v91 = vunpack.c.h.b16 %v20
  %v92 = vunpack.c.l.b16 %v21
  %v93 = vunpack.c.h.b16 %v21
  %v94 = vunpack.c.l.b16 %v22
  %v95 = vunpack.c.h.b16 %v22
  %v96 = vunpack.c.l.b16 %v23
  %v97 = vunpack.c.h.b16 %v23
  %v98 = vunpack.c.l.b16 %v24
  %v99 = vunpack.c.h.b16 %v24
  %v100 = vunpack.c.l.b16 %v25
  %v101 = vunpack.c.h.b16 %v25
  %v102 = vunpack.c.l.b16 %v26
  %v103 = vunpack.c.h.b16 %v26
  %v104 = vunpack.c.l.b16 %v27
  %v105 = vunpack.c.h.b16 %v27
  %v106 = vunpack.c.l.b16 %v28
  %v107 = vunpack.c.h.b16 %v28
  %v108 = vunpack.c.l.b16 %v29
  %v109 = vunpack.c.h.b16 %v29
  %v110 = vunpack.c.l.b16 %v30
  %v111 = vunpack.c.h.b16 %v30
  %v112 = vunpack.c.l.b16 %v31
  %v113 = vunpack.c.h.b16 %v31
  %v114 = vunpack.c.l.b16 %v32
  %v115 = vunpack.c.h.b16 %v32
  %v116 = vunpack.c.l.b16 %v33
  %v117 = vunpack.c.h.b16 %v33
  %v118 = vunpack.c.l.b16 %v34
  %v119 = vunpack.c.h.b16 %v34
  %v120 = vunpack.c.l.b16 %v35
  %v121 = vunpack.c.h.b16 %v35
  %v122 = vunpack.c.l.b16 %v36
  %v123 = vunpack.c.h.b16 %v36
  %v124 = vunpack.c.l.b16 %v37
  %v125 = vunpack.c.h.b16 %v37
  %v126 = vunpack.c.l.b16 %v38
  %v127 = vunpack.c.h.b16 %v38
  %v128 = vunpack.c.l.b16 %v39
  %v129 = vunpack.c.h.b16 %v39
  %v130 = vunpack.c.l.b16 %v40
  %v131 = vunpack.c.h.b16 %v40
  %v132 = vunpack.c.l.b16 %v41
  %v133 = vunpack.c.h.b16 %v41
  %v134 = vunpack.c.l.b16 %v42
  %v135 = vunpack.c.h.b16 %v42
  %v136 = vunpack.c.l.b16 %v43
  %v137 = vunpack.c.h.b16 %v43
  %v138 = vunpack.c.l.b16 %v44
  %v139 = vunpack.c.h.b16 %v44
  %v140 = vunpack.c.l.b16 %v45
  %v141 = vunpack.c.h.b16 %v45
  %v142 = vunpack.c.l.b16 %v46
  %v143 = vunpack.c.h.b16 %v46
  %v144 = vunpack.c.l.b16 %v47
  %v145 = vunpack.c.h.b16 %v47
  %v146 = vunpack.c.l.b16 %v48
  %v147 = vunpack.c.h.b16 %v48
  %v148 = vunpack.c.l.b16 %v49
  %v149 = vunpack.c.h.b16 %v49
  %v150 = vunpack.c.l.b16 %v50
  %v151 = vunpack.c.h.b16 %v50
  %v152 = vunpack.c.l.b16 %v51
  %v153 = vunpack.c.h.b16 %v51
  %v154 = vpack.c.b16 %v94, %v90
  %v155 = vpack.c.b16 %v95, %v91
  %v156 = vpack.c.b16 %v96, %v92
  %v157 = vpack.c.b16 %v97, %v93
  %v158 = vpack.c.b16 %v102, %v98
  %v159 = vpack.c.b16 %v103, %v99
  %v160 = vpack.c.b16 %v104, %v100
  %v161 = vpack.c.b16 %v105, %v101
  %v162 = vpack.c.b16 %v110, %v106
  %v163 = vpack.c.b16 %v111, %v107
  %v164 = vpack.c.b16 %v112, %v108
  %v165 = vpack.c.b16 %v113, %v109
  %v166 = vpack.c.b16 %v118, %v114
  %v167 = vpack.c.b16 %v119, %v115
  %v168 = vpack.c.b16 %v120, %v116
  %v169 = vpack.c.b16 %v121, %v117
  %v170 = vpack.c.b16 %v126, %v122
  %v171 = vpack.c.b16 %v127, %v123
  %v172 = vpack.c.b16 %v128, %v124
  %v173 = vpack.c.b16 %v129, %v125
  %v174 = vpack.c.b16 %v134, %v130
  %v175 = vpack.c.b16 %v135, %v131
  %v176 = vpack.c.b16 %v136, %v132
  %v177 = vpack.c.b16 %v137, %v133
  %v178 = vpack.c.b16 %v142, %v138
  %v179 = vpack.c.b16 %v143, %v139
  %v180 = vpack.c.b16 %v144, %v140
  %v181 = vpack.c.b16 %v145, %v141
  %v182 = vpack.c.b16 %v150, %v146
  %v183 = vpack.c.b16 %v151, %v147
  %v184 = vpack.c.b16 %v152, %v148
  %v185 = vpack.c.b16 %v153, %v149
  %218 = vmatprep.subr.bf16.mxu0 %v155
  %219 = vmatpush1.bf16.msra.mxu0 %v154
  %220 = vmatprep.subr.bf16.mxu0 %v159
  %221 = vmatpush1.bf16.msra.mxu0 %v158
  %222 = vmatprep.subr.bf16.mxu0 %v163
  %223 = vmatpush1.bf16.msra.mxu0 %v162
  %224 = vmatprep.subr.bf16.mxu0 %v167
  %225 = vmatpush1.bf16.msra.mxu0 %v166
  %226 = vmatprep.subr.bf16.mxu0 %v171
  %227 = vmatpush1.bf16.msra.mxu0 %v170
  %228 = vmatprep.subr.bf16.mxu0 %v175
  %229 = vmatpush1.bf16.msra.mxu0 %v174
  %230 = vmatprep.subr.bf16.mxu0 %v179
  %231 = vmatpush1.bf16.msra.mxu0 %v178
  %232 = vmatprep.subr.bf16.mxu0 %v183
  %233 = vmatpush1.bf16.msra.mxu0 %v182
  %234 = vmatprep.subr.bf16.mxu0 0
  %235 = vmatpush1.bf16.msra.mxu0 0
  %236 = vmatprep.subr.bf16.mxu0 0
  %237 = vmatpush1.bf16.msra.mxu0 0
  %238 = vmatprep.subr.bf16.mxu0 0
  %239 = vmatpush1.bf16.msra.mxu0 0
  %240 = vmatprep.subr.bf16.mxu0 0
  %241 = vmatpush1.bf16.msra.mxu0 0
  %242 = vmatprep.subr.bf16.mxu0 0
  %243 = vmatpush1.bf16.msra.mxu0 0
  %244 = vmatprep.subr.bf16.mxu0 0
  %245 = vmatpush1.bf16.msra.mxu0 0
  %246 = vmatprep.subr.bf16.mxu0 0
  %247 = vmatpush1.bf16.msra.mxu0 0
  %248 = vmatprep.subr.bf16.mxu0 0
  %249 = vmatpush1.bf16.msra.mxu0 0
  %250 = vmatprep.mubr.bf16.mxu0 0
  %251 = vmatmul.mubr.bf16.gmra.mrb[0].mxu0 %v56
  %v252 = vpop.f32.mrb[0].mxu0
  %v253 = vadd.f32 0.0, %v252
  %v254 = vpop.f32.mrb[0].mxu0
  %v255 = vadd.f32 0.0, %v254
  %v256 = vpop.f32.mrb[0].mxu0
  %v257 = vadd.f32 0.0, %v256
  %v258 = vpop.f32.mrb[0].mxu0
  %v259 = vadd.f32 0.0, %v258
  %260 = vdwg.mxu0
  %261 = vmatprep.subr.bf16.mxu0 %v157
  %262 = vmatpush1.bf16.msra.mxu0 %v156
  %263 = vmatprep.subr.bf16.mxu0 %v161
  %264 = vmatpush1.bf16.msra.mxu0 %v160
  %265 = vmatprep.subr.bf16.mxu0 %v165
  %266 = vmatpush1.bf16.msra.mxu0 %v164
  %267 = vmatprep.subr.bf16.mxu0 %v169
  %268 = vmatpush1.bf16.msra.mxu0 %v168
  %269 = vmatprep.subr.bf16.mxu0 %v173
  %270 = vmatpush1.bf16.msra.mxu0 %v172
  %271 = vmatprep.subr.bf16.mxu0 %v177
  %272 = vmatpush1.bf16.msra.mxu0 %v176
  %273 = vmatprep.subr.bf16.mxu0 %v181
  %274 = vmatpush1.bf16.msra.mxu0 %v180
  %275 = vmatprep.subr.bf16.mxu0 %v185
  %276 = vmatpush1.bf16.msra.mxu0 %v184
  %277 = vmatprep.subr.bf16.mxu0 0
  %278 = vmatpush1.bf16.msra.mxu0 0
  %279 = vmatprep.subr.bf16.mxu0 0
  %280 = vmatpush1.bf16.msra.mxu0 0
  %281 = vmatprep.subr.bf16.mxu0 0
  %282 = vmatpush1.bf16.msra.mxu0 0
  %283 = vmatprep.subr.bf16.mxu0 0
  %284 = vmatpush1.bf16.msra.mxu0 0
  %285 = vmatprep.subr.bf16.mxu0 0
  %286 = vmatpush1.bf16.msra.mxu0 0
  %287 = vmatprep.subr.bf16.mxu0 0
  %288 = vmatpush1.bf16.msra.mxu0 0
  %289 = vmatprep.subr.bf16.mxu0 0
  %290 = vmatpush1.bf16.msra.mxu0 0
  %291 = vmatprep.subr.bf16.mxu0 0
  %292 = vmatpush1.bf16.msra.mxu0 0
  %293 = vmatprep.mubr.bf16.mxu0 0
  %294 = vmatmul.mubr.bf16.gmra.mrb[0].mxu0 %v56
  %v295 = vpop.f32.mrb[0].mxu0
  %v296 = vadd.f32 0.0, %v295
  %v297 = vpop.f32.mrb[0].mxu0
  %v298 = vadd.f32 0.0, %v297
  %v299 = vpop.f32.mrb[0].mxu0
  %v300 = vadd.f32 0.0, %v299
  %v301 = vpop.f32.mrb[0].mxu0
  %v302 = vadd.f32 0.0, %v301
  %303 = vdwg.mxu0
  %v304 = vadd.f32 %v253, %v255
  %v305 = vadd.f32 %v304, %v296
  %v306 = vadd.f32 %v305, %v298
  %307 = vadd.xlane.f32.xlu0 %v306
  %v308 = vpop.xlane.xlu0 %307
  %v309 = vadd.f32 %v257, %v259
  %v310 = vadd.f32 %v309, %v300
  %v311 = vadd.f32 %v310, %v302
  %312 = vadd.xlane.f32.xlu0 %v311
  %v313 = vpop.xlane.xlu0 %312
  %v314 = vrcp.pop 512.0
  %v315 = vmul.f32 %v308, %v314
  %v316 = vmul.f32 %v313, %v314
  %v317 = vmul.f32 %v253, %v253
  %v318 = vmul.f32 %v255, %v255
  %v319 = vmul.f32 %v296, %v296
  %v320 = vmul.f32 %v298, %v298
  %v321 = vmul.f32 %v257, %v257
  %v322 = vmul.f32 %v259, %v259
  %v323 = vmul.f32 %v300, %v300
  %v324 = vmul.f32 %v302, %v302
  %v325 = vadd.f32 %v317, %v318
  %v326 = vadd.f32 %v325, %v319
  %v327 = vadd.f32 %v326, %v320
  %328 = vadd.xlane.f32.xlu0 %v327
  %v329 = vpop.xlane.xlu0 %328
  %v330 = vadd.f32 %v321, %v322
  %v331 = vadd.f32 %v330, %v323
  %v332 = vadd.f32 %v331, %v324
  %333 = vadd.xlane.f32.xlu0 %v332
  %v334 = vpop.xlane.xlu0 %333
  %v335 = vmul.f32 %v329, %v314
  %v336 = vmul.f32 %v334, %v314
  %v337 = vmul.f32 %v315, %v315
  %v338 = vmul.f32 %v316, %v316
  %v339 = vsub.f32 %v335, %v337
  %v340 = vsub.f32 %v336, %v338
  %v341 = vadd.f32 %v339, 1e-05
  %v342 = vadd.f32 %v340, 1e-05
  %v343 = vrsqrt.pop %v341
  %v344 = vrsqrt.pop %v342
  %v345 = vld [vmem:[%s2] sm:$0xff]
  %v346 = vld [vmem:[%s2 + $0x8] sm:$0xff]
  %v347 = vmul.f32 %v345, %v343
  %v348 = vmul.f32 %v346, %v344
  %v349 = vld [vmem:[%s3] sm:$0xff]
  %v350 = vld [vmem:[%s3 + $0x8] sm:$0xff]
  %v351 = vmul.f32 %v315, %v347
  %v352 = vmul.f32 %v316, %v348
  %v353 = vsub.f32 %v349, %v351
  %v354 = vsub.f32 %v350, %v352
  %356 = vset.pattern.permute.xlu0 0
  %357 = vperm.xlu0 %356, %v347
  %v358 = vpop.permute.xlu0 %357
  %361 = vset.pattern.permute.xlu0 0
  %362 = vperm.xlu0 %361, %v348
  %v363 = vpop.permute.xlu0 %362
  %v365 = vmul.f32 %v253, %v358
  %v366 = vmul.f32 %v255, %v358
  %v367 = vmul.f32 %v296, %v358
  %v368 = vmul.f32 %v298, %v358
  %v369 = vmul.f32 %v257, %v363
  %v370 = vmul.f32 %v259, %v363
  %v371 = vmul.f32 %v300, %v363
  %v372 = vmul.f32 %v302, %v363
  %374 = vset.pattern.permute.xlu0 0
  %375 = vperm.xlu0 %374, %v353
  %v376 = vpop.permute.xlu0 %375
  %379 = vset.pattern.permute.xlu0 0
  %380 = vperm.xlu0 %379, %v354
  %v381 = vpop.permute.xlu0 %380
  %v383 = vadd.f32 %v365, %v376
  %v384 = vadd.f32 %v366, %v376
  %v385 = vadd.f32 %v367, %v376
  %v386 = vadd.f32 %v368, %v376
  %v387 = vadd.f32 %v369, %v381
  %v388 = vadd.f32 %v370, %v381
  %v389 = vadd.f32 %v371, %v381
  %v390 = vadd.f32 %v372, %v381
  %vm391 = vcmp.gt.f32.partialorder %v383, 0.0
  %vm392 = vcmp.gt.f32.partialorder %v384, 0.0
  %vm393 = vcmp.gt.f32.partialorder %v385, 0.0
  %vm394 = vcmp.gt.f32.partialorder %v386, 0.0
  %vm395 = vcmp.gt.f32.partialorder %v387, 0.0
  %vm396 = vcmp.gt.f32.partialorder %v388, 0.0
  %vm397 = vcmp.gt.f32.partialorder %v389, 0.0
  %vm398 = vcmp.gt.f32.partialorder %v390, 0.0
  %v399 = vmul.f32 %v383, 0.2
  %v400 = vmul.f32 %v384, 0.2
  %v401 = vmul.f32 %v385, 0.2
  %v402 = vmul.f32 %v386, 0.2
  %v403 = vmul.f32 %v387, 0.2
  %v404 = vmul.f32 %v388, 0.2
  %v405 = vmul.f32 %v389, 0.2
  %v406 = vmul.f32 %v390, 0.2
  %v407 = vsel %vm391, %v383, %v399
  %v408 = vsel %vm392, %v384, %v400
  %v409 = vsel %vm393, %v385, %v401
  %v410 = vsel %vm394, %v386, %v402
  %v411 = vsel %vm395, %v387, %v403
  %v412 = vsel %vm396, %v388, %v404
  %v413 = vsel %vm397, %v389, %v405
  %v414 = vsel %vm398, %v390, %v406
  %v415 = vpack.c.bf16 %v411, %v407
  %v416 = vpack.c.bf16 %v412, %v408
  %v417 = vpack.c.bf16 %v413, %v409
  %v418 = vpack.c.bf16 %v414, %v410
  %v423 = vunpack.c.l.b16 %v415
  %v424 = vunpack.c.l.b16 %v416
  %v425 = vunpack.c.l.b16 %v417
  %v426 = vunpack.c.l.b16 %v418
  %v427 = vunpack.c.h.b16 %v415
  %v428 = vunpack.c.h.b16 %v416
  %v429 = vunpack.c.h.b16 %v417
  %v430 = vunpack.c.h.b16 %v418
  %v431 = vpack.c.b16 %v424, %v423
  %v432 = vpack.c.b16 %v426, %v425
  %v433 = vpack.c.b16 %v428, %v427
  %v434 = vpack.c.b16 %v430, %v429
  %439 = vst [vmem:[%s4] sm:$0xff] %v431
  %440 = vst [vmem:[%s4 + $0x8] sm:$0xff] %v432
  %441 = vst [vmem:[%s4 + $0x10] sm:$0xff] %v433
  %442 = vst [vmem:[%s4 + $0x18] sm:$0xff] %v434
  // Predicated region
  $region18: #{netd_forward.5} parent=0 // pred_check
    _
  $region19: #{netd_forward.5} parent=0 // pred_check_branch
    %444 = sbr.rel (0) target = $region21
  $region20: #{netd_forward.5} parent=0 // pred_region
    _
  $region21: #{netd_forward.5} parent=0 // pred_fallthru
    _
  // Predicated region
  $region22: #{netd_forward.5} parent=0 // pred_check
    _
  $region23: #{netd_forward.5} parent=0 // pred_check_branch
    %446 = sbr.rel (0) target = $region25
  $region24: #{netd_forward.5} parent=0 // pred_region
    _
  $region25: #{netd_forward.5} parent=0 // pred_fallthru
    _

// kernel: netd_forward.6
$region0: #{netd_forward.6}
  #allocation0 [shape = 'u32[]', space=smem, size = 0x4, offset = 0x4, fixed_abs, tag = 'smem constant byte address 0x4 - core index']
  #allocation1 [shape = 'u32[144,128]{1,0:T(1,128)}', space=vmem, size = 0x12000, scoped, tag = 'internal scratch']
  %s0 = inlined_call_operand.vmem [shape: bf16[32,256], index: 0, kind: input, shape index: {}]
  %s1 = inlined_call_operand.vmem [shape: bf16[256,128], index: 1, kind: input, shape index: {}]
  %s2 = inlined_call_operand.vmem [shape: f32[32,1], index: 2, kind: input, shape index: {}]
  %s3 = inlined_call_operand.vmem [shape: f32[32,1], index: 3, kind: input, shape index: {}]
  %s4 = inlined_call_operand.vmem [shape: bf16[32,128], index: 4, kind: output, shape index: {}]
  %s5 = sld [smem:[#allocation0]]
  $region26: #{netd_forward.6} parent=0
    _
  %s7 = ssub.s32 1, %s5
  %s8 = scalar_select 0, %s7, %s5
  // Predicated region
  $region2: #{netd_forward.6} parent=0 // pred_check
    _
  $region3: #{netd_forward.6} parent=0 // pred_check_branch
    %10 = sbr.rel (0) target = $region5
  $region4: #{netd_forward.6} parent=0 // pred_region
    _
  $region5: #{netd_forward.6} parent=0 // pred_fallthru
    _
  // Predicated region
  $region6: #{netd_forward.6} parent=0 // pred_check
    _
  $region7: #{netd_forward.6} parent=0 // pred_check_branch
    %12 = sbr.rel (0) target = $region9
  $region8: #{netd_forward.6} parent=0 // pred_region
    _
  $region9: #{netd_forward.6} parent=0 // pred_fallthru
    _
  // Predicated region
  $region10: #{netd_forward.6} parent=0 // pred_check
    _
  $region11: #{netd_forward.6} parent=0 // pred_check_branch
    %14 = sbr.rel (0) target = $region13
  $region12: #{netd_forward.6} parent=0 // pred_region
    _
  $region13: #{netd_forward.6} parent=0 // pred_fallthru
    _
  // Predicated region
  $region14: #{netd_forward.6} parent=0 // pred_check
    _
  $region15: #{netd_forward.6} parent=0 // pred_check_branch
    %16 = sbr.rel (0) target = $region17
  $region16: #{netd_forward.6} parent=0 // pred_region
    _
  $region17: #{netd_forward.6} parent=0 // pred_fallthru
    _
  %v18 = vld [vmem:[%s0] sm:$0xff]
  %v19 = vld [vmem:[%s0 + $0x8] sm:$0xff]
  %v20 = vld [vmem:[%s0 + $0x10] sm:$0xff]
  %v21 = vld [vmem:[%s0 + $0x18] sm:$0xff]
  %v22 = vld [vmem:[%s1] sm:$0xf]
  %v23 = vld [vmem:[%s1 + $0x4] sm:$0xf]
  %v24 = vld [vmem:[%s1 + $0x8] sm:$0xf]
  %v25 = vld [vmem:[%s1 + $0xc] sm:$0xf]
  %v26 = vld [vmem:[%s1 + $0x10] sm:$0xf]
  %v27 = vld [vmem:[%s1 + $0x14] sm:$0xf]
  %v28 = vld [vmem:[%s1 + $0x18] sm:$0xf]
  %v29 = vld [vmem:[%s1 + $0x1c] sm:$0xf]
  %v30 = vld [vmem:[%s1 + $0x20] sm:$0xf]
  %v31 = vld [vmem:[%s1 + $0x24] sm:$0xf]
  %v32 = vld [vmem:[%s1 + $0x28] sm:$0xf]
  %v33 = vld [vmem:[%s1 + $0x2c] sm:$0xf]
  %v34 = vld [vmem:[%s1 + $0x30] sm:$0xf]
  %v35 = vld [vmem:[%s1 + $0x34] sm:$0xf]
  %v36 = vld [vmem:[%s1 + $0x38] sm:$0xf]
  %v37 = vld [vmem:[%s1 + $0x3c] sm:$0xf]
  %v38 = vld [vmem:[%s1 + $0x40] sm:$0xf]
  %v39 = vld [vmem:[%s1 + $0x44] sm:$0xf]
  %v40 = vld [vmem:[%s1 + $0x48] sm:$0xf]
  %v41 = vld [vmem:[%s1 + $0x4c] sm:$0xf]
  %v42 = vld [vmem:[%s1 + $0x50] sm:$0xf]
  %v43 = vld [vmem:[%s1 + $0x54] sm:$0xf]
  %v44 = vld [vmem:[%s1 + $0x58] sm:$0xf]
  %v45 = vld [vmem:[%s1 + $0x5c] sm:$0xf]
  %v46 = vld [vmem:[%s1 + $0x60] sm:$0xf]
  %v47 = vld [vmem:[%s1 + $0x64] sm:$0xf]
  %v48 = vld [vmem:[%s1 + $0x68] sm:$0xf]
  %v49 = vld [vmem:[%s1 + $0x6c] sm:$0xf]
  %v50 = vld [vmem:[%s1 + $0x70] sm:$0xf]
  %v51 = vld [vmem:[%s1 + $0x74] sm:$0xf]
  %v52 = vld [vmem:[%s1 + $0x78] sm:$0xf]
  %v53 = vld [vmem:[%s1 + $0x7c] sm:$0xf]
  %v58 = vunpack.c.l.b16 %v18
  %v59 = vunpack.c.h.b16 %v18
  %v60 = vunpack.c.l.b16 %v19
  %v61 = vunpack.c.h.b16 %v19
  %v62 = vunpack.c.l.b16 %v20
  %v63 = vunpack.c.h.b16 %v20
  %v64 = vunpack.c.l.b16 %v21
  %v65 = vunpack.c.h.b16 %v21
  %v66 = vpack.c.b16 %v60, %v58
  %v67 = vpack.c.b16 %v61, %v59
  %v68 = vpack.c.b16 %v64, %v62
  %v69 = vpack.c.b16 %v65, %v63
  %v106 = vunpack.c.l.b16 %v22
  %v107 = vunpack.c.l.b16 %v23
  %v108 = vunpack.c.l.b16 %v24
  %v109 = vunpack.c.l.b16 %v25
  %v110 = vunpack.c.l.b16 %v26
  %v111 = vunpack.c.l.b16 %v27
  %v112 = vunpack.c.l.b16 %v28
  %v113 = vunpack.c.l.b16 %v29
  %v114 = vunpack.c.l.b16 %v30
  %v115 = vunpack.c.l.b16 %v31
  %v116 = vunpack.c.l.b16 %v32
  %v117 = vunpack.c.l.b16 %v33
  %v118 = vunpack.c.l.b16 %v34
  %v119 = vunpack.c.l.b16 %v35
  %v120 = vunpack.c.l.b16 %v36
  %v121 = vunpack.c.l.b16 %v37
  %v122 = vunpack.c.l.b16 %v38
  %v123 = vunpack.c.l.b16 %v39
  %v124 = vunpack.c.l.b16 %v40
  %v125 = vunpack.c.l.b16 %v41
  %v126 = vunpack.c.l.b16 %v42
  %v127 = vunpack.c.l.b16 %v43
  %v128 = vunpack.c.l.b16 %v44
  %v129 = vunpack.c.l.b16 %v45
  %v130 = vunpack.c.l.b16 %v46
  %v131 = vunpack.c.l.b16 %v47
  %v132 = vunpack.c.l.b16 %v48
  %v133 = vunpack.c.l.b16 %v49
  %v134 = vunpack.c.l.b16 %v50
  %v135 = vunpack.c.l.b16 %v51
  %v136 = vunpack.c.l.b16 %v52
  %v137 = vunpack.c.l.b16 %v53
  %v138 = vpack.c.b16 %v107, %v106
  %v139 = vpack.c.b16 %v109, %v108
  %v140 = vpack.c.b16 %v111, %v110
  %v141 = vpack.c.b16 %v113, %v112
  %v142 = vpack.c.b16 %v115, %v114
  %v143 = vpack.c.b16 %v117, %v116
  %v144 = vpack.c.b16 %v119, %v118
  %v145 = vpack.c.b16 %v121, %v120
  %v146 = vpack.c.b16 %v123, %v122
  %v147 = vpack.c.b16 %v125, %v124
  %v148 = vpack.c.b16 %v127, %v126
  %v149 = vpack.c.b16 %v129, %v128
  %v150 = vpack.c.b16 %v131, %v130
  %v151 = vpack.c.b16 %v133, %v132
  %v152 = vpack.c.b16 %v135, %v134
  %v153 = vpack.c.b16 %v137, %v136
  %170 = vmatprep.subr.bf16.mxu0 0
  %171 = vmatpush1.bf16.msra.mxu0 %v138
  %172 = vmatprep.subr.bf16.mxu0 0
  %173 = vmatpush1.bf16.msra.mxu0 %v139
  %174 = vmatprep.subr.bf16.mxu0 0
  %175 = vmatpush1.bf16.msra.mxu0 %v140
  %176 = vmatprep.subr.bf16.mxu0 0
  %177 = vmatpush1.bf16.msra.mxu0 %v141
  %178 = vmatprep.subr.bf16.mxu0 0
  %179 = vmatpush1.bf16.msra.mxu0 %v142
  %180 = vmatprep.subr.bf16.mxu0 0
  %181 = vmatpush1.bf16.msra.mxu0 %v143
  %182 = vmatprep.subr.bf16.mxu0 0
  %183 = vmatpush1.bf16.msra.mxu0 %v144
  %184 = vmatprep.subr.bf16.mxu0 0
  %185 = vmatpush1.bf16.msra.mxu0 %v145
  %186 = vmatprep.subr.bf16.mxu0 0
  %187 = vmatpush1.bf16.msra.mxu0 %v146
  %188 = vmatprep.subr.bf16.mxu0 0
  %189 = vmatpush1.bf16.msra.mxu0 %v147
  %190 = vmatprep.subr.bf16.mxu0 0
  %191 = vmatpush1.bf16.msra.mxu0 %v148
  %192 = vmatprep.subr.bf16.mxu0 0
  %193 = vmatpush1.bf16.msra.mxu0 %v149
  %194 = vmatprep.subr.bf16.mxu0 0
  %195 = vmatpush1.bf16.msra.mxu0 %v150
  %196 = vmatprep.subr.bf16.mxu0 0
  %197 = vmatpush1.bf16.msra.mxu0 %v151
  %198 = vmatprep.subr.bf16.mxu0 0
  %199 = vmatpush1.bf16.msra.mxu0 %v152
  %200 = vmatprep.subr.bf16.mxu0 0
  %201 = vmatpush1.bf16.msra.mxu0 %v153
  %202 = vmatprep.mubr.bf16.mxu0 %v67
  %203 = vmatmul.mubr.bf16.gmra.mrb[0].mxu0 %v66
  %v204 = vpop.f32.mrb[0].mxu0
  %v205 = vadd.f32 0.0, %v204
  %v206 = vpop.f32.mrb[0].mxu0
  %v207 = vpop.f32.mrb[0].mxu0
  %v208 = vadd.f32 0.0, %v207
  %v209 = vpop.f32.mrb[0].mxu0
  %210 = vmatprep.mubr.bf16.mxu0 %v69
  %211 = vmatmul.mubr.bf16.gmra.mrb[0].mxu0 %v68
  %v212 = vpop.f32.mrb[0].mxu0
  %v213 = vadd.f32 0.0, %v212
  %v214 = vpop.f32.mrb[0].mxu0
  %v215 = vpop.f32.mrb[0].mxu0
  %v216 = vadd.f32 0.0, %v215
  %v217 = vpop.f32.mrb[0].mxu0
  %218 = vdwg.mxu0
  %219 = vadd.xlane.f32.xlu0 %v205
  %v220 = vpop.xlane.xlu0 %219
  %221 = vadd.xlane.f32.xlu0 %v208
  %v222 = vpop.xlane.xlu0 %221
  %223 = vadd.xlane.f32.xlu0 %v213
  %v224 = vpop.xlane.xlu0 %223
  %225 = vadd.xlane.f32.xlu0 %v216
  %v226 = vpop.xlane.xlu0 %225
  %v227 = vrcp.pop 128.0
  %v228 = vmul.f32 %v220, %v227
  %v229 = vmul.f32 %v222, %v227
  %v230 = vmul.f32 %v224, %v227
  %v231 = vmul.f32 %v226, %v227
  %v232 = vmul.f32 %v205, %v205
  %v233 = vmul.f32 %v208, %v208
  %v234 = vmul.f32 %v213, %v213
  %v235 = vmul.f32 %v216, %v216
  %236 = vadd.xlane.f32.xlu0 %v232
  %v237 = vpop.xlane.xlu0 %236
  %238 = vadd.xlane.f32.xlu0 %v233
  %v239 = vpop.xlane.xlu0 %238
  %240 = vadd.xlane.f32.xlu0 %v234
  %v241 = vpop.xlane.xlu0 %240
  %242 = vadd.xlane.f32.xlu0 %v235
  %v243 = vpop.xlane.xlu0 %242
  %v244 = vmul.f32 %v237, %v227
  %v245 = vmul.f32 %v239, %v227
  %v246 = vmul.f32 %v241, %v227
  %v247 = vmul.f32 %v243, %v227
  %v248 = vmul.f32 %v228, %v228
  %v249 = vmul.f32 %v229, %v229
  %v250 = vmul.f32 %v230, %v230
  %v251 = vmul.f32 %v231, %v231
  %v252 = vsub.f32 %v244, %v248
  %v253 = vsub.f32 %v245, %v249
  %v254 = vsub.f32 %v246, %v250
  %v255 = vsub.f32 %v247, %v251
  %v256 = vadd.f32 %v252, 1e-05
  %v257 = vadd.f32 %v253, 1e-05
  %v258 = vadd.f32 %v254, 1e-05
  %v259 = vadd.f32 %v255, 1e-05
  %v260 = vrsqrt.pop %v256
  %v261 = vrsqrt.pop %v257
  %v262 = vrsqrt.pop %v258
  %v263 = vrsqrt.pop %v259
  %v264 = vld [vmem:[%s2] sm:$0xff]
  %v265 = vld [vmem:[%s2 + $0x8] sm:$0xff]
  %v266 = vld [vmem:[%s2 + $0x10] sm:$0xff]
  %v267 = vld [vmem:[%s2 + $0x18] sm:$0xff]
  %v268 = vmul.f32 %v264, %v260
  %v269 = vmul.f32 %v265, %v261
  %v270 = vmul.f32 %v266, %v262
  %v271 = vmul.f32 %v267, %v263
  %v272 = vld [vmem:[%s3] sm:$0xff]
  %v273 = vld [vmem:[%s3 + $0x8] sm:$0xff]
  %v274 = vld [vmem:[%s3 + $0x10] sm:$0xff]
  %v275 = vld [vmem:[%s3 + $0x18] sm:$0xff]
  %v276 = vmul.f32 %v228, %v268
  %v277 = vmul.f32 %v229, %v269
  %v278 = vmul.f32 %v230, %v270
  %v279 = vmul.f32 %v231, %v271
  %v280 = vsub.f32 %v272, %v276
  %v281 = vsub.f32 %v273, %v277
  %v282 = vsub.f32 %v274, %v278
  %v283 = vsub.f32 %v275, %v279
  %285 = vset.pattern.permute.xlu0 0
  %286 = vperm.xlu0 %285, %v268
  %v287 = vpop.permute.xlu0 %286
  %290 = vset.pattern.permute.xlu0 0
  %291 = vperm.xlu0 %290, %v269
  %v292 = vpop.permute.xlu0 %291
  %295 = vset.pattern.permute.xlu0 0
  %296 = vperm.xlu0 %295, %v270
  %v297 = vpop.permute.xlu0 %296
  %300 = vset.pattern.permute.xlu0 0
  %301 = vperm.xlu0 %300, %v271
  %v302 = vpop.permute.xlu0 %301
  %v304 = vmul.f32 %v205, %v287
  %v305 = vmul.f32 %v208, %v292
  %v306 = vmul.f32 %v213, %v297
  %v307 = vmul.f32 %v216, %v302
  %309 = vset.pattern.permute.xlu0 0
  %310 = vperm.xlu0 %309, %v280
  %v311 = vpop.permute.xlu0 %310
  %314 = vset.pattern.permute.xlu0 0
  %315 = vperm.xlu0 %314, %v281
  %v316 = vpop.permute.xlu0 %315
  %319 = vset.pattern.permute.xlu0 0
  %320 = vperm.xlu0 %319, %v282
  %v321 = vpop.permute.xlu0 %320
  %324 = vset.pattern.permute.xlu0 0
  %325 = vperm.xlu0 %324, %v283
  %v326 = vpop.permute.xlu0 %325
  %v328 = vadd.f32 %v304, %v311
  %v329 = vadd.f32 %v305, %v316
  %v330 = vadd.f32 %v306, %v321
  %v331 = vadd.f32 %v307, %v326
  %vm332 = vcmp.gt.f32.partialorder %v328, 0.0
  %vm333 = vcmp.gt.f32.partialorder %v329, 0.0
  %vm334 = vcmp.gt.f32.partialorder %v330, 0.0
  %vm335 = vcmp.gt.f32.partialorder %v331, 0.0
  %v336 = vmul.f32 %v328, 0.2
  %v337 = vmul.f32 %v329, 0.2
  %v338 = vmul.f32 %v330, 0.2
  %v339 = vmul.f32 %v331, 0.2
  %v340 = vsel %vm332, %v328, %v336
  %v341 = vsel %vm333, %v329, %v337
  %v342 = vsel %vm334, %v330, %v338
  %v343 = vsel %vm335, %v331, %v339
  %v344 = vpack.c.bf16 %v341, %v340
  %v345 = vpack.c.bf16 %v343, %v342
  %v348 = vunpack.c.l.b16 %v344
  %v349 = vunpack.c.h.b16 %v344
  %v350 = vunpack.c.l.b16 %v345
  %v351 = vunpack.c.h.b16 %v345
  %v352 = vpack.c.b16 %v348, %v348
  %v353 = vpack.c.b16 %v349, %v349
  %v354 = vpack.c.b16 %v350, %v350
  %v355 = vpack.c.b16 %v351, %v351
  %360 = vst [vmem:[%s4] sm:$0xf] %v352
  %361 = vst [vmem:[%s4 + $0x4] sm:$0xf] %v353
  %362 = vst [vmem:[%s4 + $0x8] sm:$0xf] %v354
  %363 = vst [vmem:[%s4 + $0xc] sm:$0xf] %v355
  // Predicated region
  $region18: #{netd_forward.6} parent=0 // pred_check
    _
  $region19: #{netd_forward.6} parent=0 // pred_check_branch
    %365 = sbr.rel (0) target = $region21
  $region20: #{netd_forward.6} parent=0 // pred_region
    _
  $region21: #{netd_forward.6} parent=0 // pred_fallthru
    _
  // Predicated region
  $region22: #{netd_forward.6} parent=0 // pred_check
    _
  $region23: #{netd_forward.6} parent=0 // pred_check_branch
    %367 = sbr.rel (0) target = $region25
  $region24: #{netd_forward.6} parent=0 // pred_region
    _
  $region25: #{netd_forward.6} parent=0 // pred_fallthru
    _

// kernel: netd_forward.7
$region0: #{netd_forward.7}
  #allocation0 [shape = 'u32[]', space=smem, size = 0x4, offset = 0x4, fixed_abs, tag = 'smem constant byte address 0x4 - core index']
  #allocation1 [shape = 'u32[144,128]{1,0:T(1,128)}', space=vmem, size = 0x12000, scoped, tag = 'internal scratch']
  %s0 = inlined_call_operand.vmem [shape: bf16[64,512], index: 0, kind: input, shape index: {}]
  %s1 = inlined_call_operand.vmem [shape: bf16[512,32], index: 1, kind: input, shape index: {}]
  %s2 = inlined_call_operand.vmem [shape: f32[64,1], index: 2, kind: input, shape index: {}]
  %s3 = inlined_call_operand.vmem [shape: f32[64,1], index: 3, kind: input, shape index: {}]
  %s4 = inlined_call_operand.vmem [shape: f32[64,32], index: 4, kind: input, shape index: {}]
  %s5 = inlined_call_operand.vmem [shape: f32[32,2], index: 5, kind: input, shape index: {}]
  %s6 = inlined_call_operand.hbm [shape: f32[1,2], index: 6, kind: output, shape index: {}]
  %s7 = sld [smem:[#allocation0]]
  $region34: #{netd_forward.7} parent=0
    _
  %s9 = ssub.s32 1, %s7
  %s10 = scalar_select 0, %s9, %s7
  $region1: #{netd_forward.7} parent=0
    #allocation2 [shape = 'u8[512]{0}', space=vmem, size = 0x400, scoped, tag = 'output window, operand 0, single buffered']
    #allocation3 [shape = 's32[1]{0}', space=sflag, size = 0x4, scoped, tag = 'scoped memory for netd_forward.7']
    %11 = vsyncpa [#allocation3], 0
    // Predicated region
    $region2: #{netd_forward.7} parent=1 // pred_check
      _
    $region3: #{netd_forward.7} parent=1 // pred_check_branch
      %13 = sbr.rel (0) target = $region5
    $region4: #{netd_forward.7} parent=1 // pred_region
      _
    $region5: #{netd_forward.7} parent=1 // pred_fallthru
      _
    // Predicated region
    $region6: #{netd_forward.7} parent=1 // pred_check
      _
    $region7: #{netd_forward.7} parent=1 // pred_check_branch
      %15 = sbr.rel (0) target = $region9
    $region8: #{netd_forward.7} parent=1 // pred_region
      _
    $region9: #{netd_forward.7} parent=1 // pred_fallthru
      _
    // Predicated region
    $region10: #{netd_forward.7} parent=1 // pred_check
      _
    $region11: #{netd_forward.7} parent=1 // pred_check_branch
      %17 = sbr.rel (0) target = $region13
    $region12: #{netd_forward.7} parent=1 // pred_region
      _
    $region13: #{netd_forward.7} parent=1 // pred_fallthru
      _
    // Predicated region
    $region14: #{netd_forward.7} parent=1 // pred_check
      _
    $region15: #{netd_forward.7} parent=1 // pred_check_branch
      %19 = sbr.rel (0) target = $region17
    $region16: #{netd_forward.7} parent=1 // pred_region
      _
    $region17: #{netd_forward.7} parent=1 // pred_fallthru
      _
    // Predicated region
    $region18: #{netd_forward.7} parent=1 // pred_check
      _
    $region19: #{netd_forward.7} parent=1 // pred_check_branch
      %21 = sbr.rel (0) target = $region21
    $region20: #{netd_forward.7} parent=1 // pred_region
      _
    $region21: #{netd_forward.7} parent=1 // pred_fallthru
      _
    // Predicated region
    $region22: #{netd_forward.7} parent=1 // pred_check
      _
    $region23: #{netd_forward.7} parent=1 // pred_check_branch
      %23 = sbr.rel (0) target = $region25
    $region24: #{netd_forward.7} parent=1 // pred_region
      _
    $region25: #{netd_forward.7} parent=1 // pred_fallthru
      _
    %v25 = vld [vmem:[%s0] sm:$0xff]
    %v26 = vld [vmem:[%s0 + $0x8] sm:$0xff]
    %v27 = vld [vmem:[%s0 + $0x10] sm:$0xff]
    %v28 = vld [vmem:[%s0 + $0x18] sm:$0xff]
    %v29 = vld [vmem:[%s0 + $0x20] sm:$0xff]
    %v30 = vld [vmem:[%s0 + $0x28] sm:$0xff]
    %v31 = vld [vmem:[%s0 + $0x30] sm:$0xff]
    %v32 = vld [vmem:[%s0 + $0x38] sm:$0xff]
    %v33 = vld [vmem:[%s0 + $0x40] sm:$0xff]
    %v34 = vld [vmem:[%s0 + $0x48] sm:$0xff]
    %v35 = vld [vmem:[%s0 + $0x50] sm:$0xff]
    %v36 = vld [vmem:[%s0 + $0x58] sm:$0xff]
    %v37 = vld [vmem:[%s0 + $0x60] sm:$0xff]
    %v38 = vld [vmem:[%s0 + $0x68] sm:$0xff]
    %v39 = vld [vmem:[%s0 + $0x70] sm:$0xff]
    %v40 = vld [vmem:[%s0 + $0x78] sm:$0xff]
    %v41 = vld [vmem:[%s1] sm:$0xf]
    %v42 = vld [vmem:[%s1 + $0x4] sm:$0xf]
    %v43 = vld [vmem:[%s1 + $0x8] sm:$0xf]
    %v44 = vld [vmem:[%s1 + $0xc] sm:$0xf]
    %v45 = vld [vmem:[%s1 + $0x10] sm:$0xf]
    %v46 = vld [vmem:[%s1 + $0x14] sm:$0xf]
    %v47 = vld [vmem:[%s1 + $0x18] sm:$0xf]
    %v48 = vld [vmem:[%s1 + $0x1c] sm:$0xf]
    %v49 = vld [vmem:[%s1 + $0x20] sm:$0xf]
    %v50 = vld [vmem:[%s1 + $0x24] sm:$0xf]
    %v51 = vld [vmem:[%s1 + $0x28] sm:$0xf]
    %v52 = vld [vmem:[%s1 + $0x2c] sm:$0xf]
    %v53 = vld [vmem:[%s1 + $0x30] sm:$0xf]
    %v54 = vld [vmem:[%s1 + $0x34] sm:$0xf]
    %v55 = vld [vmem:[%s1 + $0x38] sm:$0xf]
    %v56 = vld [vmem:[%s1 + $0x3c] sm:$0xf]
    %v57 = vld [vmem:[%s1 + $0x40] sm:$0xf]
    %v58 = vld [vmem:[%s1 + $0x44] sm:$0xf]
    %v59 = vld [vmem:[%s1 + $0x48] sm:$0xf]
    %v60 = vld [vmem:[%s1 + $0x4c] sm:$0xf]
    %v61 = vld [vmem:[%s1 + $0x50] sm:$0xf]
    %v62 = vld [vmem:[%s1 + $0x54] sm:$0xf]
    %v63 = vld [vmem:[%s1 + $0x58] sm:$0xf]
    %v64 = vld [vmem:[%s1 + $0x5c] sm:$0xf]
    %v65 = vld [vmem:[%s1 + $0x60] sm:$0xf]
    %v66 = vld [vmem:[%s1 + $0x64] sm:$0xf]
    %v67 = vld [vmem:[%s1 + $0x68] sm:$0xf]
    %v68 = vld [vmem:[%s1 + $0x6c] sm:$0xf]
    %v69 = vld [vmem:[%s1 + $0x70] sm:$0xf]
    %v70 = vld [vmem:[%s1 + $0x74] sm:$0xf]
    %v71 = vld [vmem:[%s1 + $0x78] sm:$0xf]
    %v72 = vld [vmem:[%s1 + $0x7c] sm:$0xf]
    %v73 = vld [vmem:[%s1 + $0x80] sm:$0xf]
    %v74 = vld [vmem:[%s1 + $0x84] sm:$0xf]
    %v75 = vld [vmem:[%s1 + $0x88] sm:$0xf]
    %v76 = vld [vmem:[%s1 + $0x8c] sm:$0xf]
    %v77 = vld [vmem:[%s1 + $0x90] sm:$0xf]
    %v78 = vld [vmem:[%s1 + $0x94] sm:$0xf]
    %v79 = vld [vmem:[%s1 + $0x98] sm:$0xf]
    %v80 = vld [vmem:[%s1 + $0x9c] sm:$0xf]
    %v81 = vld [vmem:[%s1 + $0xa0] sm:$0xf]
    %v82 = vld [vmem:[%s1 + $0xa4] sm:$0xf]
    %v83 = vld [vmem:[%s1 + $0xa8] sm:$0xf]
    %v84 = vld [vmem:[%s1 + $0xac] sm:$0xf]
    %v85 = vld [vmem:[%s1 + $0xb0] sm:$0xf]
    %v86 = vld [vmem:[%s1 + $0xb4] sm:$0xf]
    %v87 = vld [vmem:[%s1 + $0xb8] sm:$0xf]
    %v88 = vld [vmem:[%s1 + $0xbc] sm:$0xf]
    %v89 = vld [vmem:[%s1 + $0xc0] sm:$0xf]
    %v90 = vld [vmem:[%s1 + $0xc4] sm:$0xf]
    %v91 = vld [vmem:[%s1 + $0xc8] sm:$0xf]
    %v92 = vld [vmem:[%s1 + $0xcc] sm:$0xf]
    %v93 = vld [vmem:[%s1 + $0xd0] sm:$0xf]
    %v94 = vld [vmem:[%s1 + $0xd4] sm:$0xf]
    %v95 = vld [vmem:[%s1 + $0xd8] sm:$0xf]
    %v96 = vld [vmem:[%s1 + $0xdc] sm:$0xf]
    %v97 = vld [vmem:[%s1 + $0xe0] sm:$0xf]
    %v98 = vld [vmem:[%s1 + $0xe4] sm:$0xf]
    %v99 = vld [vmem:[%s1 + $0xe8] sm:$0xf]
    %v100 = vld [vmem:[%s1 + $0xec] sm:$0xf]
    %v101 = vld [vmem:[%s1 + $0xf0] sm:$0xf]
    %v102 = vld [vmem:[%s1 + $0xf4] sm:$0xf]
    %v103 = vld [vmem:[%s1 + $0xf8] sm:$0xf]
    %v104 = vld [vmem:[%s1 + $0xfc] sm:$0xf]
    %v121 = vunpack.c.l.b16 %v25
    %v122 = vunpack.c.h.b16 %v25
    %v123 = vunpack.c.l.b16 %v26
    %v124 = vunpack.c.h.b16 %v26
    %v125 = vunpack.c.l.b16 %v27
    %v126 = vunpack.c.h.b16 %v27
    %v127 = vunpack.c.l.b16 %v28
    %v128 = vunpack.c.h.b16 %v28
    %v129 = vunpack.c.l.b16 %v29
    %v130 = vunpack.c.h.b16 %v29
    %v131 = vunpack.c.l.b16 %v30
    %v132 = vunpack.c.h.b16 %v30
    %v133 = vunpack.c.l.b16 %v31
    %v134 = vunpack.c.h.b16 %v31
    %v135 = vunpack.c.l.b16 %v32
    %v136 = vunpack.c.h.b16 %v32
    %v137 = vunpack.c.l.b16 %v33
    %v138 = vunpack.c.h.b16 %v33
    %v139 = vunpack.c.l.b16 %v34
    %v140 = vunpack.c.h.b16 %v34
    %v141 = vunpack.c.l.b16 %v35
    %v142 = vunpack.c.h.b16 %v35
    %v143 = vunpack.c.l.b16 %v36
    %v144 = vunpack.c.h.b16 %v36
    %v145 = vunpack.c.l.b16 %v37
    %v146 = vunpack.c.h.b16 %v37
    %v147 = vunpack.c.l.b16 %v38
    %v148 = vunpack.c.h.b16 %v38
    %v149 = vunpack.c.l.b16 %v39
    %v150 = vunpack.c.h.b16 %v39
    %v151 = vunpack.c.l.b16 %v40
    %v152 = vunpack.c.h.b16 %v40
    %v153 = vpack.c.b16 %v125, %v121
    %v154 = vpack.c.b16 %v126, %v122
    %v155 = vpack.c.b16 %v127, %v123
    %v156 = vpack.c.b16 %v128, %v124
    %v157 = vpack.c.b16 %v133, %v129
    %v158 = vpack.c.b16 %v134, %v130
    %v159 = vpack.c.b16 %v135, %v131
    %v160 = vpack.c.b16 %v136, %v132
    %v161 = vpack.c.b16 %v141, %v137
    %v162 = vpack.c.b16 %v142, %v138
    %v163 = vpack.c.b16 %v143, %v139
    %v164 = vpack.c.b16 %v144, %v140
    %v165 = vpack.c.b16 %v149, %v145
    %v166 = vpack.c.b16 %v150, %v146
    %v167 = vpack.c.b16 %v151, %v147
    %v168 = vpack.c.b16 %v152, %v148
    %v249 = vunpack.c.l.b16 %v41
    %v250 = vunpack.c.l.b16 %v42
    %v251 = vunpack.c.l.b16 %v43
    %v252 = vunpack.c.l.b16 %v44
    %v253 = vunpack.c.l.b16 %v45
    %v254 = vunpack.c.l.b16 %v46
    %v255 = vunpack.c.l.b16 %v47
    %v256 = vunpack.c.l.b16 %v48
    %v257 = vunpack.c.l.b16 %v49
    %v258 = vunpack.c.l.b16 %v50
    %v259 = vunpack.c.l.b16 %v51
    %v260 = vunpack.c.l.b16 %v52
    %v261 = vunpack.c.l.b16 %v53
    %v262 = vunpack.c.l.b16 %v54
    %v263 = vunpack.c.l.b16 %v55
    %v264 = vunpack.c.l.b16 %v56
    %v265 = vunpack.c.l.b16 %v57
    %v266 = vunpack.c.l.b16 %v58
    %v267 = vunpack.c.l.b16 %v59
    %v268 = vunpack.c.l.b16 %v60
    %v269 = vunpack.c.l.b16 %v61
    %v270 = vunpack.c.l.b16 %v62
    %v271 = vunpack.c.l.b16 %v63
    %v272 = vunpack.c.l.b16 %v64
    %v273 = vunpack.c.l.b16 %v65
    %v274 = vunpack.c.l.b16 %v66
    %v275 = vunpack.c.l.b16 %v67
    %v276 = vunpack.c.l.b16 %v68
    %v277 = vunpack.c.l.b16 %v69
    %v278 = vunpack.c.l.b16 %v70
    %v279 = vunpack.c.l.b16 %v71
    %v280 = vunpack.c.l.b16 %v72
    %v281 = vunpack.c.l.b16 %v73
    %v282 = vunpack.c.l.b16 %v74
    %v283 = vunpack.c.l.b16 %v75
    %v284 = vunpack.c.l.b16 %v76
    %v285 = vunpack.c.l.b16 %v77
    %v286 = vunpack.c.l.b16 %v78
    %v287 = vunpack.c.l.b16 %v79
    %v288 = vunpack.c.l.b16 %v80
    %v289 = vunpack.c.l.b16 %v81
    %v290 = vunpack.c.l.b16 %v82
    %v291 = vunpack.c.l.b16 %v83
    %v292 = vunpack.c.l.b16 %v84
    %v293 = vunpack.c.l.b16 %v85
    %v294 = vunpack.c.l.b16 %v86
    %v295 = vunpack.c.l.b16 %v87
    %v296 = vunpack.c.l.b16 %v88
    %v297 = vunpack.c.l.b16 %v89
    %v298 = vunpack.c.l.b16 %v90
    %v299 = vunpack.c.l.b16 %v91
    %v300 = vunpack.c.l.b16 %v92
    %v301 = vunpack.c.l.b16 %v93
    %v302 = vunpack.c.l.b16 %v94
    %v303 = vunpack.c.l.b16 %v95
    %v304 = vunpack.c.l.b16 %v96
    %v305 = vunpack.c.l.b16 %v97
    %v306 = vunpack.c.l.b16 %v98
    %v307 = vunpack.c.l.b16 %v99
    %v308 = vunpack.c.l.b16 %v100
    %v309 = vunpack.c.l.b16 %v101
    %v310 = vunpack.c.l.b16 %v102
    %v311 = vunpack.c.l.b16 %v103
    %v312 = vunpack.c.l.b16 %v104
    %v313 = vpack.c.b16 %v250, %v249
    %v314 = vpack.c.b16 %v252, %v251
    %v315 = vpack.c.b16 %v254, %v253
    %v316 = vpack.c.b16 %v256, %v255
    %v317 = vpack.c.b16 %v258, %v257
    %v318 = vpack.c.b16 %v260, %v259
    %v319 = vpack.c.b16 %v262, %v261
    %v320 = vpack.c.b16 %v264, %v263
    %v321 = vpack.c.b16 %v266, %v265
    %v322 = vpack.c.b16 %v268, %v267
    %v323 = vpack.c.b16 %v270, %v269
    %v324 = vpack.c.b16 %v272, %v271
    %v325 = vpack.c.b16 %v274, %v273
    %v326 = vpack.c.b16 %v276, %v275
    %v327 = vpack.c.b16 %v278, %v277
    %v328 = vpack.c.b16 %v280, %v279
    %v329 = vpack.c.b16 %v282, %v281
    %v330 = vpack.c.b16 %v284, %v283
    %v331 = vpack.c.b16 %v286, %v285
    %v332 = vpack.c.b16 %v288, %v287
    %v333 = vpack.c.b16 %v290, %v289
    %v334 = vpack.c.b16 %v292, %v291
    %v335 = vpack.c.b16 %v294, %v293
    %v336 = vpack.c.b16 %v296, %v295
    %v337 = vpack.c.b16 %v298, %v297
    %v338 = vpack.c.b16 %v300, %v299
    %v339 = vpack.c.b16 %v302, %v301
    %v340 = vpack.c.b16 %v304, %v303
    %v341 = vpack.c.b16 %v306, %v305
    %v342 = vpack.c.b16 %v308, %v307
    %v343 = vpack.c.b16 %v310, %v309
    %v344 = vpack.c.b16 %v312, %v311
    %377 = vmatprep.subr.bf16.mxu0 0
    %378 = vmatpush1.bf16.msra.mxu0 %v313
    %379 = vmatprep.subr.bf16.mxu0 0
    %380 = vmatpush1.bf16.msra.mxu0 %v314
    %381 = vmatprep.subr.bf16.mxu0 0
    %382 = vmatpush1.bf16.msra.mxu0 %v315
    %383 = vmatprep.subr.bf16.mxu0 0
    %384 = vmatpush1.bf16.msra.mxu0 %v316
    %385 = vmatprep.subr.bf16.mxu0 0
    %386 = vmatpush1.bf16.msra.mxu0 %v317
    %387 = vmatprep.subr.bf16.mxu0 0
    %388 = vmatpush1.bf16.msra.mxu0 %v318
    %389 = vmatprep.subr.bf16.mxu0 0
    %390 = vmatpush1.bf16.msra.mxu0 %v319
    %391 = vmatprep.subr.bf16.mxu0 0
    %392 = vmatpush1.bf16.msra.mxu0 %v320
    %393 = vmatprep.subr.bf16.mxu0 0
    %394 = vmatpush1.bf16.msra.mxu0 %v321
    %395 = vmatprep.subr.bf16.mxu0 0
    %396 = vmatpush1.bf16.msra.mxu0 %v322
    %397 = vmatprep.subr.bf16.mxu0 0
    %398 = vmatpush1.bf16.msra.mxu0 %v323
    %399 = vmatprep.subr.bf16.mxu0 0
    %400 = vmatpush1.bf16.msra.mxu0 %v324
    %401 = vmatprep.subr.bf16.mxu0 0
    %402 = vmatpush1.bf16.msra.mxu0 %v325
    %403 = vmatprep.subr.bf16.mxu0 0
    %404 = vmatpush1.bf16.msra.mxu0 %v326
    %405 = vmatprep.subr.bf16.mxu0 0
    %406 = vmatpush1.bf16.msra.mxu0 %v327
    %407 = vmatprep.subr.bf16.mxu0 0
    %408 = vmatpush1.bf16.msra.mxu0 %v328
    %409 = vmatprep.mubr.bf16.mxu0 %v154
    %410 = vmatmul.mubr.bf16.gmra.mrb[0].mxu0 %v153
    %v411 = vpop.f32.mrb[0].mxu0
    %v412 = vadd.f32 0.0, %v411
    %v413 = vpop.f32.mrb[0].mxu0
    %v414 = vpop.f32.mrb[0].mxu0
    %v415 = vadd.f32 0.0, %v414
    %v416 = vpop.f32.mrb[0].mxu0
    %417 = vmatprep.mubr.bf16.mxu0 %v158
    %418 = vmatmul.mubr.bf16.gmra.mrb[0].mxu0 %v157
    %v419 = vpop.f32.mrb[0].mxu0
    %v420 = vadd.f32 0.0, %v419
    %v421 = vpop.f32.mrb[0].mxu0
    %v422 = vpop.f32.mrb[0].mxu0
    %v423 = vadd.f32 0.0, %v422
    %v424 = vpop.f32.mrb[0].mxu0
    %425 = vmatprep.mubr.bf16.mxu0 %v162
    %426 = vmatmul.mubr.bf16.gmra.mrb[0].mxu0 %v161
    %v427 = vpop.f32.mrb[0].mxu0
    %v428 = vadd.f32 0.0, %v427
    %v429 = vpop.f32.mrb[0].mxu0
    %v430 = vpop.f32.mrb[0].mxu0
    %v431 = vadd.f32 0.0, %v430
    %v432 = vpop.f32.mrb[0].mxu0
    %433 = vmatprep.mubr.bf16.mxu0 %v166
    %434 = vmatmul.mubr.bf16.gmra.mrb[0].mxu0 %v165
    %v435 = vpop.f32.mrb[0].mxu0
    %v436 = vadd.f32 0.0, %v435
    %v437 = vpop.f32.mrb[0].mxu0
    %v438 = vpop.f32.mrb[0].mxu0
    %v439 = vadd.f32 0.0, %v438
    %v440 = vpop.f32.mrb[0].mxu0
    %441 = vdwg.mxu0
    %442 = vmatprep.subr.bf16.mxu0 0
    %443 = vmatpush1.bf16.msra.mxu0 %v329
    %444 = vmatprep.subr.bf16.mxu0 0
    %445 = vmatpush1.bf16.msra.mxu0 %v330
    %446 = vmatprep.subr.bf16.mxu0 0
    %447 = vmatpush1.bf16.msra.mxu0 %v331
    %448 = vmatprep.subr.bf16.mxu0 0
    %449 = vmatpush1.bf16.msra.mxu0 %v332
    %450 = vmatprep.subr.bf16.mxu0 0
    %451 = vmatpush1.bf16.msra.mxu0 %v333
    %452 = vmatprep.subr.bf16.mxu0 0
    %453 = vmatpush1.bf16.msra.mxu0 %v334
    %454 = vmatprep.subr.bf16.mxu0 0
    %455 = vmatpush1.bf16.msra.mxu0 %v335
    %456 = vmatprep.subr.bf16.mxu0 0
    %457 = vmatpush1.bf16.msra.mxu0 %v336
    %458 = vmatprep.subr.bf16.mxu0 0
    %459 = vmatpush1.bf16.msra.mxu0 %v337
    %460 = vmatprep.subr.bf16.mxu0 0
    %461 = vmatpush1.bf16.msra.mxu0 %v338
    %462 = vmatprep.subr.bf16.mxu0 0
    %463 = vmatpush1.bf16.msra.mxu0 %v339
    %464 = vmatprep.subr.bf16.mxu0 0
    %465 = vmatpush1.bf16.msra.mxu0 %v340
    %466 = vmatprep.subr.bf16.mxu0 0
    %467 = vmatpush1.bf16.msra.mxu0 %v341
    %468 = vmatprep.subr.bf16.mxu0 0
    %469 = vmatpush1.bf16.msra.mxu0 %v342
    %470 = vmatprep.subr.bf16.mxu0 0
    %471 = vmatpush1.bf16.msra.mxu0 %v343
    %472 = vmatprep.subr.bf16.mxu0 0
    %473 = vmatpush1.bf16.msra.mxu0 %v344
    %474 = vmatprep.mubr.bf16.mxu0 %v156
    %475 = vmatmul.mubr.bf16.gmra.mrb[0].mxu0 %v155
    %v476 = vpop.f32.mrb[0].mxu0
    %v477 = vadd.f32 %v412, %v476
    %v478 = vpop.f32.mrb[0].mxu0
    %v479 = vpop.f32.mrb[0].mxu0
    %v480 = vadd.f32 %v415, %v479
    %v481 = vpop.f32.mrb[0].mxu0
    %482 = vmatprep.mubr.bf16.mxu0 %v160
    %483 = vmatmul.mubr.bf16.gmra.mrb[0].mxu0 %v159
    %v484 = vpop.f32.mrb[0].mxu0
    %v485 = vadd.f32 %v420, %v484
    %v486 = vpop.f32.mrb[0].mxu0
    %v487 = vpop.f32.mrb[0].mxu0
    %v488 = vadd.f32 %v423, %v487
    %v489 = vpop.f32.mrb[0].mxu0
    %490 = vmatprep.mubr.bf16.mxu0 %v164
    %491 = vmatmul.mubr.bf16.gmra.mrb[0].mxu0 %v163
    %v492 = vpop.f32.mrb[0].mxu0
    %v493 = vadd.f32 %v428, %v492
    %v494 = vpop.f32.mrb[0].mxu0
    %v495 = vpop.f32.mrb[0].mxu0
    %v496 = vadd.f32 %v431, %v495
    %v497 = vpop.f32.mrb[0].mxu0
    %498 = vmatprep.mubr.bf16.mxu0 %v168
    %499 = vmatmul.mubr.bf16.gmra.mrb[0].mxu0 %v167
    %v500 = vpop.f32.mrb[0].mxu0
    %v501 = vadd.f32 %v436, %v500
    %v502 = vpop.f32.mrb[0].mxu0
    %v503 = vpop.f32.mrb[0].mxu0
    %v504 = vadd.f32 %v439, %v503
    %v505 = vpop.f32.mrb[0].mxu0
    %506 = vdwg.mxu0
    %vm507 = vcmask 261120
    %v508 = vsel %vm507, %v477, 0.0
    %509 = vadd.xlane.f32.xlu0 %v508
    %v510 = vpop.xlane.xlu0 %509
    %v511 = vsel %vm507, %v480, 0.0
    %512 = vadd.xlane.f32.xlu0 %v511
    %v513 = vpop.xlane.xlu0 %512
    %v514 = vsel %vm507, %v485, 0.0
    %515 = vadd.xlane.f32.xlu0 %v514
    %v516 = vpop.xlane.xlu0 %515
    %v517 = vsel %vm507, %v488, 0.0
    %518 = vadd.xlane.f32.xlu0 %v517
    %v519 = vpop.xlane.xlu0 %518
    %v520 = vsel %vm507, %v493, 0.0
    %521 = vadd.xlane.f32.xlu0 %v520
    %v522 = vpop.xlane.xlu0 %521
    %v523 = vsel %vm507, %v496, 0.0
    %524 = vadd.xlane.f32.xlu0 %v523
    %v525 = vpop.xlane.xlu0 %524
    %v526 = vsel %vm507, %v501, 0.0
    %527 = vadd.xlane.f32.xlu0 %v526
    %v528 = vpop.xlane.xlu0 %527
    %v529 = vsel %vm507, %v504, 0.0
    %530 = vadd.xlane.f32.xlu0 %v529
    %v531 = vpop.xlane.xlu0 %530
    %v532 = vrcp.pop 32.0
    %v533 = vmul.f32 %v510, %v532
    %v534 = vmul.f32 %v513, %v532
    %v535 = vmul.f32 %v516, %v532
    %v536 = vmul.f32 %v519, %v532
    %v537 = vmul.f32 %v522, %v532
    %v538 = vmul.f32 %v525, %v532
    %v539 = vmul.f32 %v528, %v532
    %v540 = vmul.f32 %v531, %v532
    %v541 = vmul.f32 %v477, %v477
    %v542 = vmul.f32 %v480, %v480
    %v543 = vmul.f32 %v485, %v485
    %v544 = vmul.f32 %v488, %v488
    %v545 = vmul.f32 %v493, %v493
    %v546 = vmul.f32 %v496, %v496
    %v547 = vmul.f32 %v501, %v501
    %v548 = vmul.f32 %v504, %v504
    %v549 = vsel %vm507, %v541, 0.0
    %550 = vadd.xlane.f32.xlu0 %v549
    %v551 = vpop.xlane.xlu0 %550
    %v552 = vsel %vm507, %v542, 0.0
    %553 = vadd.xlane.f32.xlu0 %v552
    %v554 = vpop.xlane.xlu0 %553
    %v555 = vsel %vm507, %v543, 0.0
    %556 = vadd.xlane.f32.xlu0 %v555
    %v557 = vpop.xlane.xlu0 %556
    %v558 = vsel %vm507, %v544, 0.0
    %559 = vadd.xlane.f32.xlu0 %v558
    %v560 = vpop.xlane.xlu0 %559
    %v561 = vsel %vm507, %v545, 0.0
    %562 = vadd.xlane.f32.xlu0 %v561
    %v563 = vpop.xlane.xlu0 %562
    %v564 = vsel %vm507, %v546, 0.0
    %565 = vadd.xlane.f32.xlu0 %v564
    %v566 = vpop.xlane.xlu0 %565
    %v567 = vsel %vm507, %v547, 0.0
    %568 = vadd.xlane.f32.xlu0 %v567
    %v569 = vpop.xlane.xlu0 %568
    %v570 = vsel %vm507, %v548, 0.0
    %571 = vadd.xlane.f32.xlu0 %v570
    %v572 = vpop.xlane.xlu0 %571
    %v573 = vmul.f32 %v551, %v532
    %v574 = vmul.f32 %v554, %v532
    %v575 = vmul.f32 %v557, %v532
    %v576 = vmul.f32 %v560, %v532
    %v577 = vmul.f32 %v563, %v532
    %v578 = vmul.f32 %v566, %v532
    %v579 = vmul.f32 %v569, %v532
    %v580 = vmul.f32 %v572, %v532
    %v581 = vmul.f32 %v533, %v533
    %v582 = vmul.f32 %v534, %v534
    %v583 = vmul.f32 %v535, %v535
    %v584 = vmul.f32 %v536, %v536
    %v585 = vmul.f32 %v537, %v537
    %v586 = vmul.f32 %v538, %v538
    %v587 = vmul.f32 %v539, %v539
    %v588 = vmul.f32 %v540, %v540
    %v589 = vsub.f32 %v573, %v581
    %v590 = vsub.f32 %v574, %v582
    %v591 = vsub.f32 %v575, %v583
    %v592 = vsub.f32 %v576, %v584
    %v593 = vsub.f32 %v577, %v585
    %v594 = vsub.f32 %v578, %v586
    %v595 = vsub.f32 %v579, %v587
    %v596 = vsub.f32 %v580, %v588
    %v597 = vadd.f32 %v589, 1e-05
    %v598 = vadd.f32 %v590, 1e-05
    %v599 = vadd.f32 %v591, 1e-05
    %v600 = vadd.f32 %v592, 1e-05
    %v601 = vadd.f32 %v593, 1e-05
    %v602 = vadd.f32 %v594, 1e-05
    %v603 = vadd.f32 %v595, 1e-05
    %v604 = vadd.f32 %v596, 1e-05
    %v605 = vrsqrt.pop %v597
    %v606 = vrsqrt.pop %v598
    %v607 = vrsqrt.pop %v599
    %v608 = vrsqrt.pop %v600
    %v609 = vrsqrt.pop %v601
    %v610 = vrsqrt.pop %v602
    %v611 = vrsqrt.pop %v603
    %v612 = vrsqrt.pop %v604
    %v613 = vld [vmem:[%s2] sm:$0xff]
    %v614 = vld [vmem:[%s2 + $0x8] sm:$0xff]
    %v615 = vld [vmem:[%s2 + $0x10] sm:$0xff]
    %v616 = vld [vmem:[%s2 + $0x18] sm:$0xff]
    %v617 = vld [vmem:[%s2 + $0x20] sm:$0xff]
    %v618 = vld [vmem:[%s2 + $0x28] sm:$0xff]
    %v619 = vld [vmem:[%s2 + $0x30] sm:$0xff]
    %v620 = vld [vmem:[%s2 + $0x38] sm:$0xff]
    %v621 = vmul.f32 %v613, %v605
    %v622 = vmul.f32 %v614, %v606
    %v623 = vmul.f32 %v615, %v607
    %v624 = vmul.f32 %v616, %v608
    %v625 = vmul.f32 %v617, %v609
    %v626 = vmul.f32 %v618, %v610
    %v627 = vmul.f32 %v619, %v611
    %v628 = vmul.f32 %v620, %v612
    %v629 = vld [vmem:[%s3] sm:$0xff]
    %v630 = vld [vmem:[%s3 + $0x8] sm:$0xff]
    %v631 = vld [vmem:[%s3 + $0x10] sm:$0xff]
    %v632 = vld [vmem:[%s3 + $0x18] sm:$0xff]
    %v633 = vld [vmem:[%s3 + $0x20] sm:$0xff]
    %v634 = vld [vmem:[%s3 + $0x28] sm:$0xff]
    %v635 = vld [vmem:[%s3 + $0x30] sm:$0xff]
    %v636 = vld [vmem:[%s3 + $0x38] sm:$0xff]
    %v637 = vmul.f32 %v533, %v621
    %v638 = vmul.f32 %v534, %v622
    %v639 = vmul.f32 %v535, %v623
    %v640 = vmul.f32 %v536, %v624
    %v641 = vmul.f32 %v537, %v625
    %v642 = vmul.f32 %v538, %v626
    %v643 = vmul.f32 %v539, %v627
    %v644 = vmul.f32 %v540, %v628
    %v645 = vsub.f32 %v629, %v637
    %v646 = vsub.f32 %v630, %v638
    %v647 = vsub.f32 %v631, %v639
    %v648 = vsub.f32 %v632, %v640
    %v649 = vsub.f32 %v633, %v641
    %v650 = vsub.f32 %v634, %v642
    %v651 = vsub.f32 %v635, %v643
    %v652 = vsub.f32 %v636, %v644
    %654 = vset.pattern.permute.xlu0 0
    %655 = vperm.xlu0 %654, %v621
    %v656 = vpop.permute.xlu0 %655
    %659 = vset.pattern.permute.xlu0 0
    %660 = vperm.xlu0 %659, %v622
    %v661 = vpop.permute.xlu0 %660
    %664 = vset.pattern.permute.xlu0 0
    %665 = vperm.xlu0 %664, %v623
    %v666 = vpop.permute.xlu0 %665
    %669 = vset.pattern.permute.xlu0 0
    %670 = vperm.xlu0 %669, %v624
    %v671 = vpop.permute.xlu0 %670
    %674 = vset.pattern.permute.xlu0 0
    %675 = vperm.xlu0 %674, %v625
    %v676 = vpop.permute.xlu0 %675
    %679 = vset.pattern.permute.xlu0 0
    %680 = vperm.xlu0 %679, %v626
    %v681 = vpop.permute.xlu0 %680
    %684 = vset.pattern.permute.xlu0 0
    %685 = vperm.xlu0 %684, %v627
    %v686 = vpop.permute.xlu0 %685
    %689 = vset.pattern.permute.xlu0 0
    %690 = vperm.xlu0 %689, %v628
    %v691 = vpop.permute.xlu0 %690
    %v693 = vmul.f32 %v477, %v656
    %v694 = vmul.f32 %v480, %v661
    %v695 = vmul.f32 %v485, %v666
    %v696 = vmul.f32 %v488, %v671
    %v697 = vmul.f32 %v493, %v676
    %v698 = vmul.f32 %v496, %v681
    %v699 = vmul.f32 %v501, %v686
    %v700 = vmul.f32 %v504, %v691
    %702 = vset.pattern.permute.xlu0 0
    %703 = vperm.xlu0 %702, %v645
    %v704 = vpop.permute.xlu0 %703
    %707 = vset.pattern.permute.xlu0 0
    %708 = vperm.xlu0 %707, %v646
    %v709 = vpop.permute.xlu0 %708
    %712 = vset.pattern.permute.xlu0 0
    %713 = vperm.xlu0 %712, %v647
    %v714 = vpop.permute.xlu0 %713
    %717 = vset.pattern.permute.xlu0 0
    %718 = vperm.xlu0 %717, %v648
    %v719 = vpop.permute.xlu0 %718
    %722 = vset.pattern.permute.xlu0 0
    %723 = vperm.xlu0 %722, %v649
    %v724 = vpop.permute.xlu0 %723
    %727 = vset.pattern.permute.xlu0 0
    %728 = vperm.xlu0 %727, %v650
    %v729 = vpop.permute.xlu0 %728
    %732 = vset.pattern.permute.xlu0 0
    %733 = vperm.xlu0 %732, %v651
    %v734 = vpop.permute.xlu0 %733
    %737 = vset.pattern.permute.xlu0 0
    %738 = vperm.xlu0 %737, %v652
    %v739 = vpop.permute.xlu0 %738
    %v741 = vadd.f32 %v693, %v704
    %v742 = vadd.f32 %v694, %v709
    %v743 = vadd.f32 %v695, %v714
    %v744 = vadd.f32 %v696, %v719
    %v745 = vadd.f32 %v697, %v724
    %v746 = vadd.f32 %v698, %v729
    %v747 = vadd.f32 %v699, %v734
    %v748 = vadd.f32 %v700, %v739
    %vm749 = vcmp.gt.f32.partialorder %v741, 0.0
    %vm750 = vcmp.gt.f32.partialorder %v742, 0.0
    %vm751 = vcmp.gt.f32.partialorder %v743, 0.0
    %vm752 = vcmp.gt.f32.partialorder %v744, 0.0
    %vm753 = vcmp.gt.f32.partialorder %v745, 0.0
    %vm754 = vcmp.gt.f32.partialorder %v746, 0.0
    %vm755 = vcmp.gt.f32.partialorder %v747, 0.0
    %vm756 = vcmp.gt.f32.partialorder %v748, 0.0
    %v757 = vmul.f32 %v741, 0.2
    %v758 = vmul.f32 %v742, 0.2
    %v759 = vmul.f32 %v743, 0.2
    %v760 = vmul.f32 %v744, 0.2
    %v761 = vmul.f32 %v745, 0.2
    %v762 = vmul.f32 %v746, 0.2
    %v763 = vmul.f32 %v747, 0.2
    %v764 = vmul.f32 %v748, 0.2
    %v765 = vsel %vm749, %v741, %v757
    %v766 = vsel %vm750, %v742, %v758
    %v767 = vsel %vm751, %v743, %v759
    %v768 = vsel %vm752, %v744, %v760
    %v769 = vsel %vm753, %v745, %v761
    %v770 = vsel %vm754, %v746, %v762
    %v771 = vsel %vm755, %v747, %v763
    %v772 = vsel %vm756, %v748, %v764
    %v773 = vld [vmem:[%s4] sm:$0xff]
    %v774 = vld [vmem:[%s4 + $0x8] sm:$0xff]
    %v775 = vld [vmem:[%s4 + $0x10] sm:$0xff]
    %v776 = vld [vmem:[%s4 + $0x18] sm:$0xff]
    %v777 = vld [vmem:[%s4 + $0x20] sm:$0xff]
    %v778 = vld [vmem:[%s4 + $0x28] sm:$0xff]
    %v779 = vld [vmem:[%s4 + $0x30] sm:$0xff]
    %v780 = vld [vmem:[%s4 + $0x38] sm:$0xff]
    %v781 = vmul.f32 %v765, %v773
    %v782 = vmul.f32 %v766, %v774
    %v783 = vmul.f32 %v767, %v775
    %v784 = vmul.f32 %v768, %v776
    %v785 = vmul.f32 %v769, %v777
    %v786 = vmul.f32 %v770, %v778
    %v787 = vmul.f32 %v771, %v779
    %v788 = vmul.f32 %v772, %v780
    %v789 = vld [vmem:[%s5] sm:$0xff]
    %v790 = vld [vmem:[%s5 + $0x8] sm:$0xff]
    %v791 = vld [vmem:[%s5 + $0x10] sm:$0xff]
    %v792 = vld [vmem:[%s5 + $0x18] sm:$0xff]
    %v794 = vsel %vm507, %v781, 0
    %v797 = vsel %vm507, %v782, 0
    %v800 = vsel %vm507, %v783, 0
    %v803 = vsel %vm507, %v784, 0
    %v806 = vsel %vm507, %v785, 0
    %v809 = vsel %vm507, %v786, 0
    %v812 = vsel %vm507, %v787, 0
    %v815 = vsel %vm507, %v788, 0
    %817 = vmatprep.subr.mxu0 0.0
    %818 = vmatpush1.msra.mxu0 %v789
    %819 = vmatprep.subr.mxu0 0.0
    %820 = vmatpush1.msra.mxu0 %v790
    %821 = vmatprep.subr.mxu0 0.0
    %822 = vmatpush1.msra.mxu0 %v791
    %823 = vmatprep.subr.mxu0 0.0
    %824 = vmatpush1.msra.mxu0 %v792
    %825 = vmatprep.subr.mxu0 0.0
    %826 = vmatpush1.msra.mxu0 0.0
    %827 = vmatprep.subr.mxu0 0.0
    %828 = vmatpush1.msra.mxu0 0.0
    %829 = vmatprep.subr.mxu0 0.0
    %830 = vmatpush1.msra.mxu0 0.0
    %831 = vmatprep.subr.mxu0 0.0
    %832 = vmatpush1.msra.mxu0 0.0
    %833 = vmatprep.subr.mxu0 0.0
    %834 = vmatpush1.msra.mxu0 0.0
    %835 = vmatprep.subr.mxu0 0.0
    %836 = vmatpush1.msra.mxu0 0.0
    %837 = vmatprep.subr.mxu0 0.0
    %838 = vmatpush1.msra.mxu0 0.0
    %839 = vmatprep.subr.mxu0 0.0
    %840 = vmatpush1.msra.mxu0 0.0
    %841 = vmatprep.subr.mxu0 0.0
    %842 = vmatpush1.msra.mxu0 0.0
    %843 = vmatprep.subr.mxu0 0.0
    %844 = vmatpush1.msra.mxu0 0.0
    %845 = vmatprep.subr.mxu0 0.0
    %846 = vmatpush1.msra.mxu0 0.0
    %847 = vmatprep.subr.mxu0 0.0
    %848 = vmatpush1.msra.mxu0 0.0
    %849 = vmatprep.subr.mxu0 0.0
    %850 = vmatpush1.msra.mxu0 0.0
    %851 = vmatprep.subr.mxu0 0.0
    %852 = vmatpush1.msra.mxu0 0.0
    %853 = vmatprep.subr.mxu0 0.0
    %854 = vmatpush1.msra.mxu0 0.0
    %855 = vmatprep.subr.mxu0 0.0
    %856 = vmatpush1.msra.mxu0 0.0
    %857 = vmatprep.subr.mxu0 0.0
    %858 = vmatpush1.msra.mxu0 0.0
    %859 = vmatprep.subr.mxu0 0.0
    %860 = vmatpush1.msra.mxu0 0.0
    %861 = vmatprep.subr.mxu0 0.0
    %862 = vmatpush1.msra.mxu0 0.0
    %863 = vmatprep.subr.mxu0 0.0
    %864 = vmatpush1.msra.mxu0 0.0
    %865 = vmatprep.subr.mxu0 0.0
    %866 = vmatpush1.msra.mxu0 0.0
    %867 = vmatprep.subr.mxu0 0.0
    %868 = vmatpush1.msra.mxu0 0.0
    %869 = vmatprep.subr.mxu0 0.0
    %870 = vmatpush1.msra.mxu0 0.0
    %871 = vmatprep.subr.mxu0 0.0
    %872 = vmatpush1.msra.mxu0 0.0
    %873 = vmatprep.subr.mxu0 0.0
    %874 = vmatpush1.msra.mxu0 0.0
    %875 = vmatprep.subr.mxu0 0.0
    %876 = vmatpush1.msra.mxu0 0.0
    %877 = vmatprep.subr.mxu0 0.0
    %878 = vmatpush1.msra.mxu0 0.0
    %879 = vmatprep.subr.mxu0 0.0
    %880 = vmatpush1.msra.mxu0 0.0
    %881 = vmatprep.mubr.f32.mxu0 0.0
    %882 = vmatmul.mubr.f32.gmra.mrb[0].mxu0 %v794
    %v883 = vpop.f32.mrb[0].mxu0
    %v884 = vadd.f32 0.0, %v883
    %v885 = vpop.f32.mrb[0].mxu0
    %886 = vmatprep.mubr.f32.mxu0 0.0
    %887 = vmatmul.mubr.f32.gmra.mrb[0].mxu0 %v797
    %v888 = vpop.f32.mrb[0].mxu0
    %v889 = vadd.f32 0.0, %v888
    %v890 = vpop.f32.mrb[0].mxu0
    %891 = vmatprep.mubr.f32.mxu0 0.0
    %892 = vmatmul.mubr.f32.gmra.mrb[0].mxu0 %v800
    %v893 = vpop.f32.mrb[0].mxu0
    %v894 = vadd.f32 0.0, %v893
    %v895 = vpop.f32.mrb[0].mxu0
    %896 = vmatprep.mubr.f32.mxu0 0.0
    %897 = vmatmul.mubr.f32.gmra.mrb[0].mxu0 %v803
    %v898 = vpop.f32.mrb[0].mxu0
    %v899 = vadd.f32 0.0, %v898
    %v900 = vpop.f32.mrb[0].mxu0
    %901 = vmatprep.mubr.f32.mxu0 0.0
    %902 = vmatmul.mubr.f32.gmra.mrb[0].mxu0 %v806
    %v903 = vpop.f32.mrb[0].mxu0
    %v904 = vadd.f32 0.0, %v903
    %v905 = vpop.f32.mrb[0].mxu0
    %906 = vmatprep.mubr.f32.mxu0 0.0
    %907 = vmatmul.mubr.f32.gmra.mrb[0].mxu0 %v809
    %v908 = vpop.f32.mrb[0].mxu0
    %v909 = vadd.f32 0.0, %v908
    %v910 = vpop.f32.mrb[0].mxu0
    %911 = vmatprep.mubr.f32.mxu0 0.0
    %912 = vmatmul.mubr.f32.gmra.mrb[0].mxu0 %v812
    %v913 = vpop.f32.mrb[0].mxu0
    %v914 = vadd.f32 0.0, %v913
    %v915 = vpop.f32.mrb[0].mxu0
    %916 = vmatprep.mubr.f32.mxu0 0.0
    %917 = vmatmul.mubr.f32.gmra.mrb[0].mxu0 %v815
    %v918 = vpop.f32.mrb[0].mxu0
    %v919 = vadd.f32 0.0, %v918
    %v920 = vpop.f32.mrb[0].mxu0
    %921 = vdwg.mxu0
    %vm922 = vcmask 15360
    %v923 = vsel %vm922, %v884, 0.0
    %v924 = vsel %vm922, %v889, 0.0
    %v925 = vadd.f32 %v923, %v924
    %v926 = vsel %vm922, %v894, 0.0
    %v927 = vadd.f32 %v925, %v926
    %v928 = vsel %vm922, %v899, 0.0
    %v929 = vadd.f32 %v927, %v928
    %v930 = vsel %vm922, %v904, 0.0
    %v931 = vadd.f32 %v929, %v930
    %v932 = vsel %vm922, %v909, 0.0
    %v933 = vadd.f32 %v931, %v932
    %v934 = vsel %vm922, %v914, 0.0
    %v935 = vadd.f32 %v933, %v934
    %v936 = vsel %vm922, %v919, 0.0
    %v937 = vadd.f32 %v935, %v936
    %v938 = vrot.slane %v937, 4
    %v939 = vadd.f32 %v937, %v938
    %v940 = vrot.slane %v939, 2
    %v941 = vadd.f32 %v939, %v940
    %v942 = vrot.slane %v941, 1
    %v943 = vadd.f32 %v941, %v942
    %v944 = vsub.f32 0.0, %v943
    %v945 = vmul.f32 %v944, 1.442695
    %v946 = vpow.pop %v945
    %v947 = vadd.f32 %v946, 1.0
    %v948 = vrcp.pop %v947
    %v949 = vmul.f32 1.0, %v948
    %vm950 = vcmask 8192
    %951 = vst.msk [vmem:[#allocation2] sm:$0x1] %vm950, %v949
    // Predicated region
    $region26: #{netd_forward.7} parent=1 // pred_check
      _
    $region27: #{netd_forward.7} parent=1 // pred_check_branch
      %953 = sbr.rel (0) target = $region29
    $region28: #{netd_forward.7} parent=1 // pred_region
      %s955 = ssub.s32 16, 16
      %956 = vsyncadd [#allocation3], %s955
      %s958 = sshll.u32 [#allocation2], 4
      %s959 = int_to_ptr.vmem [resolvable:$true] %s958
      %961 = dma.vmem_to_hbm [thread:$0]  %s959, 16, %s6, [#allocation3]
    $region29: #{netd_forward.7} parent=1 // pred_fallthru
      _
    // Predicated region
    $region30: #{netd_forward.7} parent=1 // pred_check
      _
    $region31: #{netd_forward.7} parent=1 // pred_check_branch
      %963 = sbr.rel (0) target = $region33
    $region32: #{netd_forward.7} parent=1 // pred_region
      %964 = dma.done [#allocation3], 16
    $region33: #{netd_forward.7} parent=1 // pred_fallthru
      _
    %965 = vsyncpa [#allocation3], 1

</llo_original>
